<compile_context>
chip_gen: v7x
topology: tpu7x:2x2x1
jax: 0.10.0
libtpu: 0.0.40
codegen_flags: <defaults>
</compile_context>

<pallas_src>
import math

import jax
import jax.numpy as jnp
from jax.experimental import pallas as pl
from jax.experimental.pallas import tpu as pltpu

# Layer dims for MLPDecoder(input_size=28): 64 -> 128 -> 256 -> 512 -> 784
_IN = 64
_H1, _H2, _H3 = 128, 256, 512
_OUT = 1 * 28 * 28          # 784 (not lane-dense)
_OUT_PAD = 896              # 7 * 128, lane-dense padded output width

# Batch tile: weights ~1.2 MB bf16 resident + f32 activations (~7 KB/row) +
# double-buffered x/out tiles (~3.9 KB/row).  TB=1024 -> ~12.5 MB peak, safe
# on every chip (v7x 64 MiB VMEM included).  Sweep 2048 on v5e/v6e if desired.
_TB_MAX = 1024


def _round_up(n, m):
    return ((n + m - 1) // m) * m


def _gelu_exact(x):
    # nn.GELU() default = exact erf formulation (kept in f32).
    return 0.5 * x * (1.0 + jax.lax.erf(x * (1.0 / math.sqrt(2.0))))


def mlp_decoder_kernel(x_ref,
                       w1_ref, b1_ref,
                       w2_ref, b2_ref,
                       w3_ref, b3_ref,
                       w4_ref, b4_ref,
                       o_ref):
    h = x_ref[...]                                                    # (TB, 64) f32

    # bf16 MXU matmuls with f32 accumulation; bias/GELU epilogues in f32.
    h = jnp.dot(h.astype(jnp.bfloat16), w1_ref[...],
                preferred_element_type=jnp.float32) + b1_ref[...]     # (TB, 128)
    h = _gelu_exact(h)

    h = jnp.dot(h.astype(jnp.bfloat16), w2_ref[...],
                preferred_element_type=jnp.float32) + b2_ref[...]     # (TB, 256)
    h = _gelu_exact(h)

    h = jnp.dot(h.astype(jnp.bfloat16), w3_ref[...],
                preferred_element_type=jnp.float32) + b3_ref[...]     # (TB, 512)
    h = _gelu_exact(h)

    h = jnp.dot(h.astype(jnp.bfloat16), w4_ref[...],
                preferred_element_type=jnp.float32) + b4_ref[...]     # (TB, 896)
    o_ref[...] = jax.nn.sigmoid(h).astype(o_ref.dtype)


def mlp_decoder_forward(x, params):
    """x: (B, 64) float32 -> (B, 1, 28, 28) float32."""
    B = x.shape[0]
    (w1, b1), (w2, b2), (w3, b3), (w4, b4) = params

    # Pad last layer to lane-dense width (896 = 7*128) with exact zeros.
    w4p = jnp.zeros((_H3, _OUT_PAD), w4.dtype).at[:, :_OUT].set(w4)
    b4p = jnp.zeros((1, _OUT_PAD), b4.dtype).at[:, :_OUT].set(b4)

    # Pre-cast weights to bf16 once (MXU-native); keep biases f32.
    w1b = w1.astype(jnp.bfloat16)
    w2b = w2.astype(jnp.bfloat16)
    w3b = w3.astype(jnp.bfloat16)
    w4b = w4p.astype(jnp.bfloat16)

    # Batch tiling: TB multiple of 8, capped for VMEM; pad B up to a multiple.
    tb = min(_TB_MAX, _round_up(B, 8))
    b_pad = _round_up(B, tb)
    if b_pad != B:
        x = jnp.pad(x, ((0, b_pad - B), (0, 0)))
    grid = (b_pad // tb,)

    const2 = lambda i: (0, 0)   # weights/biases resident across all iterations
    in_specs = [
        pl.BlockSpec((tb, _IN), lambda i: (i, 0)),            # x tile
        pl.BlockSpec((_IN, _H1), const2), pl.BlockSpec((1, _H1), const2),
        pl.BlockSpec((_H1, _H2), const2), pl.BlockSpec((1, _H2), const2),
        pl.BlockSpec((_H2, _H3), const2), pl.BlockSpec((1, _H3), const2),
        pl.BlockSpec((_H3, _OUT_PAD), const2), pl.BlockSpec((1, _OUT_PAD), const2),
    ]
    out_specs = pl.BlockSpec((tb, _OUT_PAD), lambda i: (i, 0))

    weight_elems = _IN * _H1 + _H1 * _H2 + _H2 * _H3 + _H3 * _OUT_PAD
    bias_elems = _H1 + _H2 + _H3 + _OUT_PAD
    cost = pl.CostEstimate(
        flops=int(2 * b_pad * weight_elems),
        transcendentals=int(b_pad * (_H1 + _H2 + _H3 + _OUT_PAD)),
        bytes_accessed=int(4 * b_pad * (_IN + _OUT_PAD)
                           + 2 * weight_elems + 4 * bias_elems),
    )

    flat = pl.pallas_call(
        mlp_decoder_kernel,
        out_shape=jax.ShapeDtypeStruct((b_pad, _OUT_PAD), jnp.float32),
        grid=grid,
        in_specs=in_specs,
        out_specs=out_specs,
        compiler_params=pltpu.CompilerParams(
            dimension_semantics=("parallel",),
            vmem_limit_bytes=48 * 1024 * 1024,
        ),
        cost_estimate=cost,
    )(x, w1b, b1, w2b, b2, w3b, b3, w4b, b4p)

    # Slice off batch padding and the zero-padded (sigmoid(0)=0.5) columns
    # BEFORE reshaping; then nn.Unflatten(1, (1, 28, 28)) -> NCHW.
    return flat[:B, :_OUT].reshape(B, 1, 28, 28)


def init_params(key):
    """Deterministic init mirroring Net.weights_init (weight ~ N(0, 0.01));
    biases use PyTorch Linear's default small uniform range."""
    dims = [(_IN, _H1), (_H1, _H2), (_H2, _H3), (_H3, _OUT)]
    params = []
    for (fan_in, fan_out) in dims:
        key, kw, kb = jax.random.split(key, 3)
        # stored as (in, out) == transpose of PyTorch's (out, in) weight
        w = 0.01 * jax.random.normal(kw, (fan_in, fan_out), dtype=jnp.float32)
        bound = 1.0 / math.sqrt(fan_in)
        b = jax.random.uniform(kb, (1, fan_out), minval=-bound, maxval=bound,
                               dtype=jnp.float32)
        params.append((w, b))
    return params


def reference_forward(x, params):
    """Pure-JAX f32 reference of the same math (un-padded, un-tiled)."""
    h = x
    for i, (w, b) in enumerate(params):
        h = h @ w + b
        if i < len(params) - 1:
            h = _gelu_exact(h)
        else:
            h = jax.nn.sigmoid(h)
    return h.reshape(x.shape[0], 1, 28, 28)


if __name__ == "__main__":
    key = jax.random.PRNGKey(0)
    key, kx = jax.random.split(key)

    B = 8
    x = jax.random.normal(kx, (B, 64), dtype=jnp.float32)
    params = init_params(key)

    out = mlp_decoder_forward(x, params)
    out = jax.block_until_ready(out)

    ref = reference_forward(x, params)
    assert out.shape == (B, 1, 28, 28), out.shape
    # bf16 matmul operands (f32 accumulation) => looser tolerance vs f32 ref.
    assert jnp.allclose(out, ref, atol=5e-3, rtol=1e-2), \
        f"mismatch vs reference, max err {jnp.max(jnp.abs(out - ref))}"

    print("KERNEL_OK")
</pallas_src>

<mosaic_0001>
module attributes {stable_mosaic.version = 11 : i64} {
  func.func @mlp_decoder_kernel(%arg0: i32, %arg1: memref<8x64xf32, #tpu.memory_space<vmem>>, %arg2: memref<64x128xbf16, #tpu.memory_space<vmem>>, %arg3: memref<1x128xf32, #tpu.memory_space<vmem>>, %arg4: memref<128x256xbf16, #tpu.memory_space<vmem>>, %arg5: memref<1x256xf32, #tpu.memory_space<vmem>>, %arg6: memref<256x512xbf16, #tpu.memory_space<vmem>>, %arg7: memref<1x512xf32, #tpu.memory_space<vmem>>, %arg8: memref<512x896xbf16, #tpu.memory_space<vmem>>, %arg9: memref<1x896xf32, #tpu.memory_space<vmem>>, %arg10: memref<8x896xf32, #tpu.memory_space<vmem>>) attributes {dimension_semantics = [#tpu.dimension_semantics<parallel>], iteration_bounds = array<i64: 1>, scalar_prefetch = 0 : i64, scratch_operands = 0 : i64, tpu.core_type = #tpu.core_type<tc>, window_params = [{transform_indices = @transform_0, window_bounds = array<i64: 8, 64>}, {pipeline_mode = #tpu.pipeline_mode<synchronous>, transform_indices = @transform_1, window_bounds = array<i64: 64, 128>}, {pipeline_mode = #tpu.pipeline_mode<synchronous>, transform_indices = @transform_2, window_bounds = array<i64: 1, 128>}, {pipeline_mode = #tpu.pipeline_mode<synchronous>, transform_indices = @transform_3, window_bounds = array<i64: 128, 256>}, {pipeline_mode = #tpu.pipeline_mode<synchronous>, transform_indices = @transform_4, window_bounds = array<i64: 1, 256>}, {pipeline_mode = #tpu.pipeline_mode<synchronous>, transform_indices = @transform_5, window_bounds = array<i64: 256, 512>}, {pipeline_mode = #tpu.pipeline_mode<synchronous>, transform_indices = @transform_6, window_bounds = array<i64: 1, 512>}, {pipeline_mode = #tpu.pipeline_mode<synchronous>, transform_indices = @transform_7, window_bounds = array<i64: 512, 896>}, {pipeline_mode = #tpu.pipeline_mode<synchronous>, transform_indices = @transform_8, window_bounds = array<i64: 1, 896>}, {transform_indices = @transform_9, window_bounds = array<i64: 8, 896>}]} {
    %c0 = arith.constant 0 : index
    %c0_0 = arith.constant 0 : index
    %0 = vector.load %arg1[%c0, %c0_0] : memref<8x64xf32, #tpu.memory_space<vmem>>, vector<8x64xf32>
    %1 = arith.truncf %0 : vector<8x64xf32> to vector<8x64xbf16>
    %c0_1 = arith.constant 0 : index
    %c0_2 = arith.constant 0 : index
    %2 = vector.load %arg2[%c0_1, %c0_2] : memref<64x128xbf16, #tpu.memory_space<vmem>>, vector<64x128xbf16>
    %cst = arith.constant dense<0.000000e+00> : vector<8x128xf32>
    %3 = tpu.matmul %1, %2, %cst {dimension_numbers = #tpu.dot_dimension_numbers<[1], [0], [0], [1], [0, 0, 1, 1], [], []>} : vector<8x64xbf16>, vector<64x128xbf16>, vector<8x128xf32> -> vector<8x128xf32>
    %c0_3 = arith.constant 0 : index
    %c0_4 = arith.constant 0 : index
    %4 = vector.load %arg3[%c0_3, %c0_4] : memref<1x128xf32, #tpu.memory_space<vmem>>, vector<1x128xf32>
    %5 = vector.broadcast %4 : vector<1x128xf32> to vector<8x128xf32>
    %6 = arith.addf %3, %5 : vector<8x128xf32>
    %cst_5 = arith.constant 5.000000e-01 : f32
    %7 = vector.broadcast %cst_5 : f32 to vector<8x128xf32>
    %8 = arith.mulf %7, %6 : vector<8x128xf32>
    %cst_6 = arith.constant 0.707106769 : f32
    %9 = vector.broadcast %cst_6 : f32 to vector<8x128xf32>
    %10 = arith.mulf %6, %9 : vector<8x128xf32>
    %11 = math.erf %10 : vector<8x128xf32>
    %cst_7 = arith.constant 1.000000e+00 : f32
    %12 = vector.broadcast %cst_7 : f32 to vector<8x128xf32>
    %13 = arith.addf %12, %11 : vector<8x128xf32>
    %14 = arith.mulf %8, %13 : vector<8x128xf32>
    %15 = arith.truncf %14 : vector<8x128xf32> to vector<8x128xbf16>
    %c0_8 = arith.constant 0 : index
    %c0_9 = arith.constant 0 : index
    %16 = vector.load %arg4[%c0_8, %c0_9] : memref<128x256xbf16, #tpu.memory_space<vmem>>, vector<128x256xbf16>
    %cst_10 = arith.constant dense<0.000000e+00> : vector<8x256xf32>
    %17 = tpu.matmul %15, %16, %cst_10 {dimension_numbers = #tpu.dot_dimension_numbers<[1], [0], [0], [1], [0, 0, 1, 1], [], []>} : vector<8x128xbf16>, vector<128x256xbf16>, vector<8x256xf32> -> vector<8x256xf32>
    %c0_11 = arith.constant 0 : index
    %c0_12 = arith.constant 0 : index
    %18 = vector.load %arg5[%c0_11, %c0_12] : memref<1x256xf32, #tpu.memory_space<vmem>>, vector<1x256xf32>
    %19 = vector.broadcast %18 : vector<1x256xf32> to vector<8x256xf32>
    %20 = arith.addf %17, %19 : vector<8x256xf32>
    %cst_13 = arith.constant 5.000000e-01 : f32
    %21 = vector.broadcast %cst_13 : f32 to vector<8x256xf32>
    %22 = arith.mulf %21, %20 : vector<8x256xf32>
    %cst_14 = arith.constant 0.707106769 : f32
    %23 = vector.broadcast %cst_14 : f32 to vector<8x256xf32>
    %24 = arith.mulf %20, %23 : vector<8x256xf32>
    %25 = math.erf %24 : vector<8x256xf32>
    %cst_15 = arith.constant 1.000000e+00 : f32
    %26 = vector.broadcast %cst_15 : f32 to vector<8x256xf32>
    %27 = arith.addf %26, %25 : vector<8x256xf32>
    %28 = arith.mulf %22, %27 : vector<8x256xf32>
    %29 = arith.truncf %28 : vector<8x256xf32> to vector<8x256xbf16>
    %c0_16 = arith.constant 0 : index
    %c0_17 = arith.constant 0 : index
    %30 = vector.load %arg6[%c0_16, %c0_17] : memref<256x512xbf16, #tpu.memory_space<vmem>>, vector<256x512xbf16>
    %cst_18 = arith.constant dense<0.000000e+00> : vector<8x512xf32>
    %31 = tpu.matmul %29, %30, %cst_18 {dimension_numbers = #tpu.dot_dimension_numbers<[1], [0], [0], [1], [0, 0, 1, 1], [], []>} : vector<8x256xbf16>, vector<256x512xbf16>, vector<8x512xf32> -> vector<8x512xf32>
    %c0_19 = arith.constant 0 : index
    %c0_20 = arith.constant 0 : index
    %32 = vector.load %arg7[%c0_19, %c0_20] : memref<1x512xf32, #tpu.memory_space<vmem>>, vector<1x512xf32>
    %33 = vector.broadcast %32 : vector<1x512xf32> to vector<8x512xf32>
    %34 = arith.addf %31, %33 : vector<8x512xf32>
    %cst_21 = arith.constant 5.000000e-01 : f32
    %35 = vector.broadcast %cst_21 : f32 to vector<8x512xf32>
    %36 = arith.mulf %35, %34 : vector<8x512xf32>
    %cst_22 = arith.constant 0.707106769 : f32
    %37 = vector.broadcast %cst_22 : f32 to vector<8x512xf32>
    %38 = arith.mulf %34, %37 : vector<8x512xf32>
    %39 = math.erf %38 : vector<8x512xf32>
    %cst_23 = arith.constant 1.000000e+00 : f32
    %40 = vector.broadcast %cst_23 : f32 to vector<8x512xf32>
    %41 = arith.addf %40, %39 : vector<8x512xf32>
    %42 = arith.mulf %36, %41 : vector<8x512xf32>
    %43 = arith.truncf %42 : vector<8x512xf32> to vector<8x512xbf16>
    %c0_24 = arith.constant 0 : index
    %c0_25 = arith.constant 0 : index
    %44 = vector.load %arg8[%c0_24, %c0_25] : memref<512x896xbf16, #tpu.memory_space<vmem>>, vector<512x896xbf16>
    %cst_26 = arith.constant dense<0.000000e+00> : vector<8x896xf32>
    %45 = tpu.matmul %43, %44, %cst_26 {dimension_numbers = #tpu.dot_dimension_numbers<[1], [0], [0], [1], [0, 0, 1, 1], [], []>} : vector<8x512xbf16>, vector<512x896xbf16>, vector<8x896xf32> -> vector<8x896xf32>
    %c0_27 = arith.constant 0 : index
    %c0_28 = arith.constant 0 : index
    %46 = vector.load %arg9[%c0_27, %c0_28] : memref<1x896xf32, #tpu.memory_space<vmem>>, vector<1x896xf32>
    %47 = vector.broadcast %46 : vector<1x896xf32> to vector<8x896xf32>
    %48 = arith.addf %45, %47 : vector<8x896xf32>
    %49 = arith.negf %48 : vector<8x896xf32>
    %50 = math.exp %49 : vector<8x896xf32>
    %cst_29 = arith.constant 1.000000e+00 : f32
    %51 = vector.broadcast %cst_29 : f32 to vector<8x896xf32>
    %52 = arith.addf %51, %50 : vector<8x896xf32>
    %53 = arith.divf %51, %52 : vector<8x896xf32>
    %c0_30 = arith.constant 0 : index
    %c0_31 = arith.constant 0 : index
    %54 = vector.load %arg10[%c0_30, %c0_31] : memref<8x896xf32, #tpu.memory_space<vmem>>, vector<8x896xf32>
    tpu.vector_store %arg10[%c0_30, %c0_31], %53 {strides = array<i32>} : memref<8x896xf32, #tpu.memory_space<vmem>>, vector<8x896xf32>,
    return
  }
  func.func @transform_0(%arg0: i32) -> (i32, i32) {
    %c0_i32 = arith.constant 0 : i32
    %c0_i32_0 = arith.constant 0 : i32
    return %arg0, %c0_i32 : i32, i32
  }
  func.func @transform_1(%arg0: i32) -> (i32, i32) {
    %c0_i32 = arith.constant 0 : i32
    %c0_i32_0 = arith.constant 0 : i32
    %c0_i32_1 = arith.constant 0 : i32
    return %c0_i32, %c0_i32_0 : i32, i32
  }
  func.func @transform_2(%arg0: i32) -> (i32, i32) {
    %c0_i32 = arith.constant 0 : i32
    %c0_i32_0 = arith.constant 0 : i32
    %c0_i32_1 = arith.constant 0 : i32
    return %c0_i32, %c0_i32_0 : i32, i32
  }
  func.func @transform_3(%arg0: i32) -> (i32, i32) {
    %c0_i32 = arith.constant 0 : i32
    %c0_i32_0 = arith.constant 0 : i32
    %c0_i32_1 = arith.constant 0 : i32
    return %c0_i32, %c0_i32_0 : i32, i32
  }
  func.func @transform_4(%arg0: i32) -> (i32, i32) {
    %c0_i32 = arith.constant 0 : i32
    %c0_i32_0 = arith.constant 0 : i32
    %c0_i32_1 = arith.constant 0 : i32
    return %c0_i32, %c0_i32_0 : i32, i32
  }
  func.func @transform_5(%arg0: i32) -> (i32, i32) {
    %c0_i32 = arith.constant 0 : i32
    %c0_i32_0 = arith.constant 0 : i32
    %c0_i32_1 = arith.constant 0 : i32
    return %c0_i32, %c0_i32_0 : i32, i32
  }
  func.func @transform_6(%arg0: i32) -> (i32, i32) {
    %c0_i32 = arith.constant 0 : i32
    %c0_i32_0 = arith.constant 0 : i32
    %c0_i32_1 = arith.constant 0 : i32
    return %c0_i32, %c0_i32_0 : i32, i32
  }
  func.func @transform_7(%arg0: i32) -> (i32, i32) {
    %c0_i32 = arith.constant 0 : i32
    %c0_i32_0 = arith.constant 0 : i32
    %c0_i32_1 = arith.constant 0 : i32
    return %c0_i32, %c0_i32_0 : i32, i32
  }
  func.func @transform_8(%arg0: i32) -> (i32, i32) {
    %c0_i32 = arith.constant 0 : i32
    %c0_i32_0 = arith.constant 0 : i32
    %c0_i32_1 = arith.constant 0 : i32
    return %c0_i32, %c0_i32_0 : i32, i32
  }
  func.func @transform_9(%arg0: i32) -> (i32, i32) {
    %c0_i32 = arith.constant 0 : i32
    %c0_i32_0 = arith.constant 0 : i32
    return %arg0, %c0_i32 : i32, i32
  }
}

</mosaic_0001>

<llo_original>
// kernel: tpu_custom_call.1
$region0: #{tpu_custom_call.1}
  #allocation0 [shape = 'u32[]', space=smem, size = 0x4, offset = 0x4, fixed_abs, tag = 'smem constant byte address 0x4 - core index']
  #allocation1 [shape = 'u32[144,128]{1,0:T(1,128)}', space=vmem, size = 0x12000, scoped, tag = 'internal scratch']
  %s0 = inlined_call_operand.hbm [shape: f32[8,64], index: 0, kind: input, shape index: {}]
  %s1 = inlined_call_operand.hbm [shape: bf16[64,128], index: 1, kind: input, shape index: {}]
  %s2 = inlined_call_operand.vmem [shape: f32[1,128], index: 2, kind: input, shape index: {}]
  %s3 = inlined_call_operand.hbm [shape: bf16[128,256], index: 3, kind: input, shape index: {}]
  %s4 = inlined_call_operand.vmem [shape: f32[1,256], index: 4, kind: input, shape index: {}]
  %s5 = inlined_call_operand.hbm [shape: bf16[256,512], index: 5, kind: input, shape index: {}]
  %s6 = inlined_call_operand.vmem [shape: f32[1,512], index: 6, kind: input, shape index: {}]
  %s7 = inlined_call_operand.hbm [shape: bf16[512,896], index: 7, kind: input, shape index: {}]
  %s8 = inlined_call_operand.vmem [shape: f32[1,896], index: 8, kind: input, shape index: {}]
  %s9 = inlined_call_operand.hbm [shape: f32[8,896], index: 9, kind: output, shape index: {}]
  %s10 = sld [smem:[#allocation0]]
  $region66: #{tpu_custom_call.1} parent=0
    _
  %s12 = ssub.s32 1, %s10
  %s13 = scalar_select 0, %s12, %s10
  $region1: #{tpu_custom_call.1} parent=0
    #allocation2 [shape = 'u8[4096]{0}', space=vmem, size = 0x1000, scoped, tag = 'input window, operand 0, single buffered']
    #allocation3 [shape = 's32[1]{0}', space=sflag, size = 0x4, scoped, tag = 'scoped memory for tpu_custom_call.1']
    #allocation4 [shape = 's32[1]{0}', space=sflag, size = 0x4, scoped, tag = 'scoped memory for tpu_custom_call.1']
    #allocation5 [shape = 'u8[16384]{0}', space=vmem, size = 0x4000, scoped, tag = 'input window, operand 1, single buffered']
    #allocation6 [shape = 's32[1]{0}', space=sflag, size = 0x4, scoped, tag = 'scoped memory for tpu_custom_call.1']
    #allocation7 [shape = 'u8[65536]{0}', space=vmem, size = 0x10000, scoped, tag = 'input window, operand 3, single buffered']
    #allocation8 [shape = 'u8[262144]{0}', space=vmem, size = 0x40000, scoped, tag = 'input window, operand 5, single buffered']
    #allocation9 [shape = 's32[1]{0}', space=sflag, size = 0x4, scoped, tag = 'scoped memory for tpu_custom_call.1']
    #allocation10 [shape = 'u8[917504]{0}', space=vmem, size = 0xe0000, scoped, tag = 'input window, operand 7, single buffered']
    #allocation11 [shape = 'u8[28672]{0}', space=vmem, size = 0x7000, scoped, tag = 'output window, operand 0, single buffered']
    %14 = vsyncpa [#allocation3], 0
    %15 = vsyncpa [#allocation6], 0
    %16 = vsyncpa [#allocation9], 0
    %17 = vsyncpa [#allocation4], 0
    // Predicated region
    $region2: #{tpu_custom_call.1} parent=1 // pred_check
      _
    $region3: #{tpu_custom_call.1} parent=1 // pred_check_branch
      %19 = sbr.rel (0) target = $region5
    $region4: #{tpu_custom_call.1} parent=1 // pred_region
      %s21 = ssub.s32 128, 128
      %22 = vsyncadd [#allocation3], %s21
      %s24 = sshll.u32 [#allocation2], 4
      %s25 = int_to_ptr.vmem [resolvable:$true] %s24
      %27 = dma.hbm_to_vmem [thread:$0]  %s0, 128, %s25, [#allocation3]
    $region5: #{tpu_custom_call.1} parent=1 // pred_fallthru
      _
    // Predicated region
    $region6: #{tpu_custom_call.1} parent=1 // pred_check
      _
    $region7: #{tpu_custom_call.1} parent=1 // pred_check_branch
      %29 = sbr.rel (0) target = $region9
    $region8: #{tpu_custom_call.1} parent=1 // pred_region
      %s31 = ssub.s32 512, 512
      %32 = vsyncadd [#allocation6], %s31
      %s33 = sshll.u32 [#allocation5], 4
      %s34 = int_to_ptr.vmem [resolvable:$true] %s33
      %39 = dma.hbm_to_vmem [thread:$0]  %s1, 512, %s34, [#allocation6], 64, 64, 4
    $region9: #{tpu_custom_call.1} parent=1 // pred_fallthru
      _
    // Predicated region
    $region10: #{tpu_custom_call.1} parent=1 // pred_check
      _
    $region11: #{tpu_custom_call.1} parent=1 // pred_check_branch
      %41 = sbr.rel (0) target = $region13
    $region12: #{tpu_custom_call.1} parent=1 // pred_region
      _
    $region13: #{tpu_custom_call.1} parent=1 // pred_fallthru
      _
    // Predicated region
    $region14: #{tpu_custom_call.1} parent=1 // pred_check
      _
    $region15: #{tpu_custom_call.1} parent=1 // pred_check_branch
      %43 = sbr.rel (0) target = $region17
    $region16: #{tpu_custom_call.1} parent=1 // pred_region
      %s45 = ssub.s32 2048, 2048
      %46 = vsyncadd [#allocation6], %s45
      %s47 = sshll.u32 [#allocation7], 4
      %s48 = int_to_ptr.vmem [resolvable:$true] %s47
      %53 = dma.hbm_to_vmem [thread:$0]  %s3, 2048, %s48, [#allocation6], 128, 128, 8
    $region17: #{tpu_custom_call.1} parent=1 // pred_fallthru
      _
    // Predicated region
    $region18: #{tpu_custom_call.1} parent=1 // pred_check
      _
    $region19: #{tpu_custom_call.1} parent=1 // pred_check_branch
      %55 = sbr.rel (0) target = $region21
    $region20: #{tpu_custom_call.1} parent=1 // pred_region
      _
    $region21: #{tpu_custom_call.1} parent=1 // pred_fallthru
      _
    // Predicated region
    $region22: #{tpu_custom_call.1} parent=1 // pred_check
      _
    $region23: #{tpu_custom_call.1} parent=1 // pred_check_branch
      %57 = sbr.rel (0) target = $region25
    $region24: #{tpu_custom_call.1} parent=1 // pred_region
      %s59 = ssub.s32 8192, 8192
      %60 = vsyncadd [#allocation9], %s59
      %s61 = sshll.u32 [#allocation8], 4
      %s62 = int_to_ptr.vmem [resolvable:$true] %s61
      %67 = dma.hbm_to_vmem [thread:$0]  %s5, 8192, %s62, [#allocation9], 256, 256, 16
    $region25: #{tpu_custom_call.1} parent=1 // pred_fallthru
      _
    // Predicated region
    $region26: #{tpu_custom_call.1} parent=1 // pred_check
      _
    $region27: #{tpu_custom_call.1} parent=1 // pred_check_branch
      %69 = sbr.rel (0) target = $region29
    $region28: #{tpu_custom_call.1} parent=1 // pred_region
      _
    $region29: #{tpu_custom_call.1} parent=1 // pred_fallthru
      _
    // Predicated region
    $region30: #{tpu_custom_call.1} parent=1 // pred_check
      _
    $region31: #{tpu_custom_call.1} parent=1 // pred_check_branch
      %71 = sbr.rel (0) target = $region33
    $region32: #{tpu_custom_call.1} parent=1 // pred_region
      %s73 = ssub.s32 28672, 28672
      %74 = vsyncadd [#allocation9], %s73
      %s75 = sshll.u32 [#allocation10], 4
      %s76 = int_to_ptr.vmem [resolvable:$true] %s75
      %81 = dma.hbm_to_vmem [thread:$0]  %s7, 28672, %s76, [#allocation9], 448, 448, 28
    $region33: #{tpu_custom_call.1} parent=1 // pred_fallthru
      _
    // Predicated region
    $region34: #{tpu_custom_call.1} parent=1 // pred_check
      _
    $region35: #{tpu_custom_call.1} parent=1 // pred_check_branch
      %83 = sbr.rel (0) target = $region37
    $region36: #{tpu_custom_call.1} parent=1 // pred_region
      _
    $region37: #{tpu_custom_call.1} parent=1 // pred_fallthru
      _
    // Predicated region
    $region38: #{tpu_custom_call.1} parent=1 // pred_check
      _
    $region39: #{tpu_custom_call.1} parent=1 // pred_check_branch
      %85 = sbr.rel (0) target = $region41
    $region40: #{tpu_custom_call.1} parent=1 // pred_region
      %86 = dma.done [#allocation3], 128
    $region41: #{tpu_custom_call.1} parent=1 // pred_fallthru
      _
    // Predicated region
    $region42: #{tpu_custom_call.1} parent=1 // pred_check
      _
    $region43: #{tpu_custom_call.1} parent=1 // pred_check_branch
      %88 = sbr.rel (0) target = $region45
    $region44: #{tpu_custom_call.1} parent=1 // pred_region
      %89 = dma.done [#allocation6], 512
    $region45: #{tpu_custom_call.1} parent=1 // pred_fallthru
      _
    // Predicated region
    $region46: #{tpu_custom_call.1} parent=1 // pred_check
      _
    $region47: #{tpu_custom_call.1} parent=1 // pred_check_branch
      %91 = sbr.rel (0) target = $region49
    $region48: #{tpu_custom_call.1} parent=1 // pred_region
      %92 = dma.done [#allocation6], 2048
    $region49: #{tpu_custom_call.1} parent=1 // pred_fallthru
      _
    // Predicated region
    $region50: #{tpu_custom_call.1} parent=1 // pred_check
      _
    $region51: #{tpu_custom_call.1} parent=1 // pred_check_branch
      %94 = sbr.rel (0) target = $region53
    $region52: #{tpu_custom_call.1} parent=1 // pred_region
      %95 = dma.done [#allocation9], 8192
    $region53: #{tpu_custom_call.1} parent=1 // pred_fallthru
      _
    // Predicated region
    $region54: #{tpu_custom_call.1} parent=1 // pred_check
      _
    $region55: #{tpu_custom_call.1} parent=1 // pred_check_branch
      %97 = sbr.rel (0) target = $region57
    $region56: #{tpu_custom_call.1} parent=1 // pred_region
      %98 = dma.done [#allocation9], 28672
    $region57: #{tpu_custom_call.1} parent=1 // pred_fallthru
      _
    %v100 = vld [vmem:[#allocation2] sm:$0xff]
    %v101 = vpack.c.bf16 %v100, %v100
    %v102 = vld [vmem:[#allocation5] sm:$0xf]
    %v103 = vld [vmem:[#allocation5 + $0x4] sm:$0xf]
    %v104 = vld [vmem:[#allocation5 + $0x8] sm:$0xf]
    %v105 = vld [vmem:[#allocation5 + $0xc] sm:$0xf]
    %v106 = vld [vmem:[#allocation5 + $0x10] sm:$0xf]
    %v107 = vld [vmem:[#allocation5 + $0x14] sm:$0xf]
    %v108 = vld [vmem:[#allocation5 + $0x18] sm:$0xf]
    %v109 = vld [vmem:[#allocation5 + $0x1c] sm:$0xf]
    %v110 = vld [vmem:[%s2] sm:$0x1]
    %v112 = vlaneseq
    %v113 = vshrl.u32 %v112, 7
    %v114 = vsub.s32 0, %v113
    %v115 = vrot.slane %v110, %v114
    %v125 = vunpack.c.l.b16 %v102
    %v126 = vunpack.c.l.b16 %v103
    %v127 = vunpack.c.l.b16 %v104
    %v128 = vunpack.c.l.b16 %v105
    %v129 = vunpack.c.l.b16 %v106
    %v130 = vunpack.c.l.b16 %v107
    %v131 = vunpack.c.l.b16 %v108
    %v132 = vunpack.c.l.b16 %v109
    %v133 = vpack.c.b16 %v126, %v125
    %v134 = vpack.c.b16 %v128, %v127
    %v135 = vpack.c.b16 %v130, %v129
    %v136 = vpack.c.b16 %v132, %v131
    %vm141 = vcmask 523264
    %v143 = vsel %vm141, %v101, 0
    %145 = vmatprep.subr.bf16.mxu0 0
    %146 = vmatpush1.bf16.msra.mxu0 %v133
    %147 = vmatprep.subr.bf16.mxu0 0
    %148 = vmatpush1.bf16.msra.mxu0 %v134
    %149 = vmatprep.subr.bf16.mxu0 0
    %150 = vmatpush1.bf16.msra.mxu0 %v135
    %151 = vmatprep.subr.bf16.mxu0 0
    %152 = vmatpush1.bf16.msra.mxu0 %v136
    %153 = vmatprep.subr.bf16.mxu0 0
    %154 = vmatpush1.bf16.msra.mxu0 0
    %155 = vmatprep.subr.bf16.mxu0 0
    %156 = vmatpush1.bf16.msra.mxu0 0
    %157 = vmatprep.subr.bf16.mxu0 0
    %158 = vmatpush1.bf16.msra.mxu0 0
    %159 = vmatprep.subr.bf16.mxu0 0
    %160 = vmatpush1.bf16.msra.mxu0 0
    %161 = vmatprep.subr.bf16.mxu0 0
    %162 = vmatpush1.bf16.msra.mxu0 0
    %163 = vmatprep.subr.bf16.mxu0 0
    %164 = vmatpush1.bf16.msra.mxu0 0
    %165 = vmatprep.subr.bf16.mxu0 0
    %166 = vmatpush1.bf16.msra.mxu0 0
    %167 = vmatprep.subr.bf16.mxu0 0
    %168 = vmatpush1.bf16.msra.mxu0 0
    %169 = vmatprep.subr.bf16.mxu0 0
    %170 = vmatpush1.bf16.msra.mxu0 0
    %171 = vmatprep.subr.bf16.mxu0 0
    %172 = vmatpush1.bf16.msra.mxu0 0
    %173 = vmatprep.subr.bf16.mxu0 0
    %174 = vmatpush1.bf16.msra.mxu0 0
    %175 = vmatprep.subr.bf16.mxu0 0
    %176 = vmatpush1.bf16.msra.mxu0 0
    %177 = vmatprep.mubr.bf16.mxu0 0
    %178 = vmatmul.mubr.bf16.gmra.mrb[0].mxu0 %v143
    %v179 = vpop.f32.mrb[0].mxu0
    %v180 = vadd.f32 %v115, %v179
    %v181 = vpop.f32.mrb[0].mxu0
    %v182 = vpop.f32.mrb[0].mxu0
    %v183 = vpop.f32.mrb[0].mxu0
    %184 = vdwg.mxu0
    %v185 = vmul.f32 %v180, 0.5
    %v186 = vmul.f32 %v180, 0.70710677
    %v187 = verf.f32.pop %v186
    %v188 = vadd.f32 %v187, 1.0
    %v189 = vmul.f32 %v185, %v188
    %v190 = vpack.c.bf16 %v189, %v189
    %v191 = vld [vmem:[#allocation7] sm:$0xff]
    %v192 = vld [vmem:[#allocation7 + $0x8] sm:$0xff]
    %v193 = vld [vmem:[#allocation7 + $0x10] sm:$0xff]
    %v194 = vld [vmem:[#allocation7 + $0x18] sm:$0xff]
    %v195 = vld [vmem:[#allocation7 + $0x20] sm:$0xff]
    %v196 = vld [vmem:[#allocation7 + $0x28] sm:$0xff]
    %v197 = vld [vmem:[#allocation7 + $0x30] sm:$0xff]
    %v198 = vld [vmem:[#allocation7 + $0x38] sm:$0xff]
    %v199 = vld [vmem:[#allocation7 + $0x40] sm:$0xff]
    %v200 = vld [vmem:[#allocation7 + $0x48] sm:$0xff]
    %v201 = vld [vmem:[#allocation7 + $0x50] sm:$0xff]
    %v202 = vld [vmem:[#allocation7 + $0x58] sm:$0xff]
    %v203 = vld [vmem:[#allocation7 + $0x60] sm:$0xff]
    %v204 = vld [vmem:[#allocation7 + $0x68] sm:$0xff]
    %v205 = vld [vmem:[#allocation7 + $0x70] sm:$0xff]
    %v206 = vld [vmem:[#allocation7 + $0x78] sm:$0xff]
    %v207 = vld [vmem:[%s4] sm:$0x3]
    %v209 = vlaneseq
    %v210 = vshrl.u32 %v209, 7
    %v211 = vsub.s32 0, %v210
    %v212 = vrot.slane %v207, %v211
    %v213 = vlaneseq
    %v214 = vshrl.u32 %v213, 7
    %v215 = vsub.s32 1, %v214
    %v216 = vrot.slane %v207, %v215
    %v235 = vunpack.c.l.b16 %v191
    %v236 = vunpack.c.h.b16 %v191
    %v237 = vunpack.c.l.b16 %v192
    %v238 = vunpack.c.h.b16 %v192
    %v239 = vunpack.c.l.b16 %v193
    %v240 = vunpack.c.h.b16 %v193
    %v241 = vunpack.c.l.b16 %v194
    %v242 = vunpack.c.h.b16 %v194
    %v243 = vunpack.c.l.b16 %v195
    %v244 = vunpack.c.h.b16 %v195
    %v245 = vunpack.c.l.b16 %v196
    %v246 = vunpack.c.h.b16 %v196
    %v247 = vunpack.c.l.b16 %v197
    %v248 = vunpack.c.h.b16 %v197
    %v249 = vunpack.c.l.b16 %v198
    %v250 = vunpack.c.h.b16 %v198
    %v251 = vunpack.c.l.b16 %v199
    %v252 = vunpack.c.h.b16 %v199
    %v253 = vunpack.c.l.b16 %v200
    %v254 = vunpack.c.h.b16 %v200
    %v255 = vunpack.c.l.b16 %v201
    %v256 = vunpack.c.h.b16 %v201
    %v257 = vunpack.c.l.b16 %v202
    %v258 = vunpack.c.h.b16 %v202
    %v259 = vunpack.c.l.b16 %v203
    %v260 = vunpack.c.h.b16 %v203
    %v261 = vunpack.c.l.b16 %v204
    %v262 = vunpack.c.h.b16 %v204
    %v263 = vunpack.c.l.b16 %v205
    %v264 = vunpack.c.h.b16 %v205
    %v265 = vunpack.c.l.b16 %v206
    %v266 = vunpack.c.h.b16 %v206
    %v267 = vpack.c.b16 %v237, %v235
    %v268 = vpack.c.b16 %v238, %v236
    %v269 = vpack.c.b16 %v241, %v239
    %v270 = vpack.c.b16 %v242, %v240
    %v271 = vpack.c.b16 %v245, %v243
    %v272 = vpack.c.b16 %v246, %v244
    %v273 = vpack.c.b16 %v249, %v247
    %v274 = vpack.c.b16 %v250, %v248
    %v275 = vpack.c.b16 %v253, %v251
    %v276 = vpack.c.b16 %v254, %v252
    %v277 = vpack.c.b16 %v257, %v255
    %v278 = vpack.c.b16 %v258, %v256
    %v279 = vpack.c.b16 %v261, %v259
    %v280 = vpack.c.b16 %v262, %v260
    %v281 = vpack.c.b16 %v265, %v263
    %v282 = vpack.c.b16 %v266, %v264
    %299 = vmatprep.subr.bf16.mxu0 %v268
    %300 = vmatpush1.bf16.msra.mxu0 %v267
    %301 = vmatprep.subr.bf16.mxu0 %v270
    %302 = vmatpush1.bf16.msra.mxu0 %v269
    %303 = vmatprep.subr.bf16.mxu0 %v272
    %304 = vmatpush1.bf16.msra.mxu0 %v271
    %305 = vmatprep.subr.bf16.mxu0 %v274
    %306 = vmatpush1.bf16.msra.mxu0 %v273
    %307 = vmatprep.subr.bf16.mxu0 %v276
    %308 = vmatpush1.bf16.msra.mxu0 %v275
    %309 = vmatprep.subr.bf16.mxu0 %v278
    %310 = vmatpush1.bf16.msra.mxu0 %v277
    %311 = vmatprep.subr.bf16.mxu0 %v280
    %312 = vmatpush1.bf16.msra.mxu0 %v279
    %313 = vmatprep.subr.bf16.mxu0 %v282
    %314 = vmatpush1.bf16.msra.mxu0 %v281
    %315 = vmatprep.subr.bf16.mxu0 0
    %316 = vmatpush1.bf16.msra.mxu0 0
    %317 = vmatprep.subr.bf16.mxu0 0
    %318 = vmatpush1.bf16.msra.mxu0 0
    %319 = vmatprep.subr.bf16.mxu0 0
    %320 = vmatpush1.bf16.msra.mxu0 0
    %321 = vmatprep.subr.bf16.mxu0 0
    %322 = vmatpush1.bf16.msra.mxu0 0
    %323 = vmatprep.subr.bf16.mxu0 0
    %324 = vmatpush1.bf16.msra.mxu0 0
    %325 = vmatprep.subr.bf16.mxu0 0
    %326 = vmatpush1.bf16.msra.mxu0 0
    %327 = vmatprep.subr.bf16.mxu0 0
    %328 = vmatpush1.bf16.msra.mxu0 0
    %329 = vmatprep.subr.bf16.mxu0 0
    %330 = vmatpush1.bf16.msra.mxu0 0
    %331 = vmatprep.mubr.bf16.mxu0 0
    %332 = vmatmul.mubr.bf16.gmra.mrb[0].mxu0 %v190
    %v333 = vpop.f32.mrb[0].mxu0
    %v334 = vadd.f32 %v212, %v333
    %v335 = vpop.f32.mrb[0].mxu0
    %v336 = vadd.f32 %v216, %v335
    %v337 = vpop.f32.mrb[0].mxu0
    %v338 = vpop.f32.mrb[0].mxu0
    %339 = vdwg.mxu0
    %v340 = vmul.f32 %v334, 0.5
    %v341 = vmul.f32 %v336, 0.5
    %v342 = vmul.f32 %v334, 0.70710677
    %v343 = vmul.f32 %v336, 0.70710677
    %v344 = verf.f32.pop %v342
    %v345 = verf.f32.pop %v343
    %v346 = vadd.f32 %v344, 1.0
    %v347 = vadd.f32 %v345, 1.0
    %v348 = vmul.f32 %v340, %v346
    %v349 = vmul.f32 %v341, %v347
    %v350 = vpack.c.bf16 %v348, %v348
    %v351 = vpack.c.bf16 %v349, %v349
    %v352 = vld [vmem:[#allocation8] sm:$0xff]
    %v353 = vld [vmem:[#allocation8 + $0x8] sm:$0xff]
    %v354 = vld [vmem:[#allocation8 + $0x10] sm:$0xff]
    %v355 = vld [vmem:[#allocation8 + $0x18] sm:$0xff]
    %v356 = vld [vmem:[#allocation8 + $0x20] sm:$0xff]
    %v357 = vld [vmem:[#allocation8 + $0x28] sm:$0xff]
    %v358 = vld [vmem:[#allocation8 + $0x30] sm:$0xff]
    %v359 = vld [vmem:[#allocation8 + $0x38] sm:$0xff]
    %v360 = vld [vmem:[#allocation8 + $0x40] sm:$0xff]
    %v361 = vld [vmem:[#allocation8 + $0x48] sm:$0xff]
    %v362 = vld [vmem:[#allocation8 + $0x50] sm:$0xff]
    %v363 = vld [vmem:[#allocation8 + $0x58] sm:$0xff]
    %v364 = vld [vmem:[#allocation8 + $0x60] sm:$0xff]
    %v365 = vld [vmem:[#allocation8 + $0x68] sm:$0xff]
    %v366 = vld [vmem:[#allocation8 + $0x70] sm:$0xff]
    %v367 = vld [vmem:[#allocation8 + $0x78] sm:$0xff]
    %v368 = vld [vmem:[#allocation8 + $0x80] sm:$0xff]
    %v369 = vld [vmem:[#allocation8 + $0x88] sm:$0xff]
    %v370 = vld [vmem:[#allocation8 + $0x90] sm:$0xff]
    %v371 = vld [vmem:[#allocation8 + $0x98] sm:$0xff]
    %v372 = vld [vmem:[#allocation8 + $0xa0] sm:$0xff]
    %v373 = vld [vmem:[#allocation8 + $0xa8] sm:$0xff]
    %v374 = vld [vmem:[#allocation8 + $0xb0] sm:$0xff]
    %v375 = vld [vmem:[#allocation8 + $0xb8] sm:$0xff]
    %v376 = vld [vmem:[#allocation8 + $0xc0] sm:$0xff]
    %v377 = vld [vmem:[#allocation8 + $0xc8] sm:$0xff]
    %v378 = vld [vmem:[#allocation8 + $0xd0] sm:$0xff]
    %v379 = vld [vmem:[#allocation8 + $0xd8] sm:$0xff]
    %v380 = vld [vmem:[#allocation8 + $0xe0] sm:$0xff]
    %v381 = vld [vmem:[#allocation8 + $0xe8] sm:$0xff]
    %v382 = vld [vmem:[#allocation8 + $0xf0] sm:$0xff]
    %v383 = vld [vmem:[#allocation8 + $0xf8] sm:$0xff]
    %v384 = vld [vmem:[#allocation8 + $0x100] sm:$0xff]
    %v385 = vld [vmem:[#allocation8 + $0x108] sm:$0xff]
    %v386 = vld [vmem:[#allocation8 + $0x110] sm:$0xff]
    %v387 = vld [vmem:[#allocation8 + $0x118] sm:$0xff]
    %v388 = vld [vmem:[#allocation8 + $0x120] sm:$0xff]
    %v389 = vld [vmem:[#allocation8 + $0x128] sm:$0xff]
    %v390 = vld [vmem:[#allocation8 + $0x130] sm:$0xff]
    %v391 = vld [vmem:[#allocation8 + $0x138] sm:$0xff]
    %v392 = vld [vmem:[#allocation8 + $0x140] sm:$0xff]
    %v393 = vld [vmem:[#allocation8 + $0x148] sm:$0xff]
    %v394 = vld [vmem:[#allocation8 + $0x150] sm:$0xff]
    %v395 = vld [vmem:[#allocation8 + $0x158] sm:$0xff]
    %v396 = vld [vmem:[#allocation8 + $0x160] sm:$0xff]
    %v397 = vld [vmem:[#allocation8 + $0x168] sm:$0xff]
    %v398 = vld [vmem:[#allocation8 + $0x170] sm:$0xff]
    %v399 = vld [vmem:[#allocation8 + $0x178] sm:$0xff]
    %v400 = vld [vmem:[#allocation8 + $0x180] sm:$0xff]
    %v401 = vld [vmem:[#allocation8 + $0x188] sm:$0xff]
    %v402 = vld [vmem:[#allocation8 + $0x190] sm:$0xff]
    %v403 = vld [vmem:[#allocation8 + $0x198] sm:$0xff]
    %v404 = vld [vmem:[#allocation8 + $0x1a0] sm:$0xff]
    %v405 = vld [vmem:[#allocation8 + $0x1a8] sm:$0xff]
    %v406 = vld [vmem:[#allocation8 + $0x1b0] sm:$0xff]
    %v407 = vld [vmem:[#allocation8 + $0x1b8] sm:$0xff]
    %v408 = vld [vmem:[#allocation8 + $0x1c0] sm:$0xff]
    %v409 = vld [vmem:[#allocation8 + $0x1c8] sm:$0xff]
    %v410 = vld [vmem:[#allocation8 + $0x1d0] sm:$0xff]
    %v411 = vld [vmem:[#allocation8 + $0x1d8] sm:$0xff]
    %v412 = vld [vmem:[#allocation8 + $0x1e0] sm:$0xff]
    %v413 = vld [vmem:[#allocation8 + $0x1e8] sm:$0xff]
    %v414 = vld [vmem:[#allocation8 + $0x1f0] sm:$0xff]
    %v415 = vld [vmem:[#allocation8 + $0x1f8] sm:$0xff]
    %v416 = vld [vmem:[%s6] sm:$0xf]
    %v418 = vlaneseq
    %v419 = vshrl.u32 %v418, 7
    %v420 = vsub.s32 0, %v419
    %v421 = vrot.slane %v416, %v420
    %v422 = vlaneseq
    %v423 = vshrl.u32 %v422, 7
    %v424 = vsub.s32 1, %v423
    %v425 = vrot.slane %v416, %v424
    %v426 = vlaneseq
    %v427 = vshrl.u32 %v426, 7
    %v428 = vsub.s32 2, %v427
    %v429 = vrot.slane %v416, %v428
    %v430 = vlaneseq
    %v431 = vshrl.u32 %v430, 7
    %v432 = vsub.s32 3, %v431
    %v433 = vrot.slane %v416, %v432
    %v502 = vunpack.c.l.b16 %v352
    %v503 = vunpack.c.h.b16 %v352
    %v504 = vunpack.c.l.b16 %v353
    %v505 = vunpack.c.h.b16 %v353
    %v506 = vunpack.c.l.b16 %v354
    %v507 = vunpack.c.h.b16 %v354
    %v508 = vunpack.c.l.b16 %v355
    %v509 = vunpack.c.h.b16 %v355
    %v510 = vunpack.c.l.b16 %v356
    %v511 = vunpack.c.h.b16 %v356
    %v512 = vunpack.c.l.b16 %v357
    %v513 = vunpack.c.h.b16 %v357
    %v514 = vunpack.c.l.b16 %v358
    %v515 = vunpack.c.h.b16 %v358
    %v516 = vunpack.c.l.b16 %v359
    %v517 = vunpack.c.h.b16 %v359
    %v518 = vunpack.c.l.b16 %v360
    %v519 = vunpack.c.h.b16 %v360
    %v520 = vunpack.c.l.b16 %v361
    %v521 = vunpack.c.h.b16 %v361
    %v522 = vunpack.c.l.b16 %v362
    %v523 = vunpack.c.h.b16 %v362
    %v524 = vunpack.c.l.b16 %v363
    %v525 = vunpack.c.h.b16 %v363
    %v526 = vunpack.c.l.b16 %v364
    %v527 = vunpack.c.h.b16 %v364
    %v528 = vunpack.c.l.b16 %v365
    %v529 = vunpack.c.h.b16 %v365
    %v530 = vunpack.c.l.b16 %v366
    %v531 = vunpack.c.h.b16 %v366
    %v532 = vunpack.c.l.b16 %v367
    %v533 = vunpack.c.h.b16 %v367
    %v534 = vunpack.c.l.b16 %v368
    %v535 = vunpack.c.h.b16 %v368
    %v536 = vunpack.c.l.b16 %v369
    %v537 = vunpack.c.h.b16 %v369
    %v538 = vunpack.c.l.b16 %v370
    %v539 = vunpack.c.h.b16 %v370
    %v540 = vunpack.c.l.b16 %v371
    %v541 = vunpack.c.h.b16 %v371
    %v542 = vunpack.c.l.b16 %v372
    %v543 = vunpack.c.h.b16 %v372
    %v544 = vunpack.c.l.b16 %v373
    %v545 = vunpack.c.h.b16 %v373
    %v546 = vunpack.c.l.b16 %v374
    %v547 = vunpack.c.h.b16 %v374
    %v548 = vunpack.c.l.b16 %v375
    %v549 = vunpack.c.h.b16 %v375
    %v550 = vunpack.c.l.b16 %v376
    %v551 = vunpack.c.h.b16 %v376
    %v552 = vunpack.c.l.b16 %v377
    %v553 = vunpack.c.h.b16 %v377
    %v554 = vunpack.c.l.b16 %v378
    %v555 = vunpack.c.h.b16 %v378
    %v556 = vunpack.c.l.b16 %v379
    %v557 = vunpack.c.h.b16 %v379
    %v558 = vunpack.c.l.b16 %v380
    %v559 = vunpack.c.h.b16 %v380
    %v560 = vunpack.c.l.b16 %v381
    %v561 = vunpack.c.h.b16 %v381
    %v562 = vunpack.c.l.b16 %v382
    %v563 = vunpack.c.h.b16 %v382
    %v564 = vunpack.c.l.b16 %v383
    %v565 = vunpack.c.h.b16 %v383
    %v566 = vunpack.c.l.b16 %v384
    %v567 = vunpack.c.h.b16 %v384
    %v568 = vunpack.c.l.b16 %v385
    %v569 = vunpack.c.h.b16 %v385
    %v570 = vunpack.c.l.b16 %v386
    %v571 = vunpack.c.h.b16 %v386
    %v572 = vunpack.c.l.b16 %v387
    %v573 = vunpack.c.h.b16 %v387
    %v574 = vunpack.c.l.b16 %v388
    %v575 = vunpack.c.h.b16 %v388
    %v576 = vunpack.c.l.b16 %v389
    %v577 = vunpack.c.h.b16 %v389
    %v578 = vunpack.c.l.b16 %v390
    %v579 = vunpack.c.h.b16 %v390
    %v580 = vunpack.c.l.b16 %v391
    %v581 = vunpack.c.h.b16 %v391
    %v582 = vunpack.c.l.b16 %v392
    %v583 = vunpack.c.h.b16 %v392
    %v584 = vunpack.c.l.b16 %v393
    %v585 = vunpack.c.h.b16 %v393
    %v586 = vunpack.c.l.b16 %v394
    %v587 = vunpack.c.h.b16 %v394
    %v588 = vunpack.c.l.b16 %v395
    %v589 = vunpack.c.h.b16 %v395
    %v590 = vunpack.c.l.b16 %v396
    %v591 = vunpack.c.h.b16 %v396
    %v592 = vunpack.c.l.b16 %v397
    %v593 = vunpack.c.h.b16 %v397
    %v594 = vunpack.c.l.b16 %v398
    %v595 = vunpack.c.h.b16 %v398
    %v596 = vunpack.c.l.b16 %v399
    %v597 = vunpack.c.h.b16 %v399
    %v598 = vunpack.c.l.b16 %v400
    %v599 = vunpack.c.h.b16 %v400
    %v600 = vunpack.c.l.b16 %v401
    %v601 = vunpack.c.h.b16 %v401
    %v602 = vunpack.c.l.b16 %v402
    %v603 = vunpack.c.h.b16 %v402
    %v604 = vunpack.c.l.b16 %v403
    %v605 = vunpack.c.h.b16 %v403
    %v606 = vunpack.c.l.b16 %v404
    %v607 = vunpack.c.h.b16 %v404
    %v608 = vunpack.c.l.b16 %v405
    %v609 = vunpack.c.h.b16 %v405
    %v610 = vunpack.c.l.b16 %v406
    %v611 = vunpack.c.h.b16 %v406
    %v612 = vunpack.c.l.b16 %v407
    %v613 = vunpack.c.h.b16 %v407
    %v614 = vunpack.c.l.b16 %v408
    %v615 = vunpack.c.h.b16 %v408
    %v616 = vunpack.c.l.b16 %v409
    %v617 = vunpack.c.h.b16 %v409
    %v618 = vunpack.c.l.b16 %v410
    %v619 = vunpack.c.h.b16 %v410
    %v620 = vunpack.c.l.b16 %v411
    %v621 = vunpack.c.h.b16 %v411
    %v622 = vunpack.c.l.b16 %v412
    %v623 = vunpack.c.h.b16 %v412
    %v624 = vunpack.c.l.b16 %v413
    %v625 = vunpack.c.h.b16 %v413
    %v626 = vunpack.c.l.b16 %v414
    %v627 = vunpack.c.h.b16 %v414
    %v628 = vunpack.c.l.b16 %v415
    %v629 = vunpack.c.h.b16 %v415
    %v630 = vpack.c.b16 %v506, %v502
    %v631 = vpack.c.b16 %v507, %v503
    %v632 = vpack.c.b16 %v508, %v504
    %v633 = vpack.c.b16 %v509, %v505
    %v634 = vpack.c.b16 %v514, %v510
    %v635 = vpack.c.b16 %v515, %v511
    %v636 = vpack.c.b16 %v516, %v512
    %v637 = vpack.c.b16 %v517, %v513
    %v638 = vpack.c.b16 %v522, %v518
    %v639 = vpack.c.b16 %v523, %v519
    %v640 = vpack.c.b16 %v524, %v520
    %v641 = vpack.c.b16 %v525, %v521
    %v642 = vpack.c.b16 %v530, %v526
    %v643 = vpack.c.b16 %v531, %v527
    %v644 = vpack.c.b16 %v532, %v528
    %v645 = vpack.c.b16 %v533, %v529
    %v646 = vpack.c.b16 %v538, %v534
    %v647 = vpack.c.b16 %v539, %v535
    %v648 = vpack.c.b16 %v540, %v536
    %v649 = vpack.c.b16 %v541, %v537
    %v650 = vpack.c.b16 %v546, %v542
    %v651 = vpack.c.b16 %v547, %v543
    %v652 = vpack.c.b16 %v548, %v544
    %v653 = vpack.c.b16 %v549, %v545
    %v654 = vpack.c.b16 %v554, %v550
    %v655 = vpack.c.b16 %v555, %v551
    %v656 = vpack.c.b16 %v556, %v552
    %v657 = vpack.c.b16 %v557, %v553
    %v658 = vpack.c.b16 %v562, %v558
    %v659 = vpack.c.b16 %v563, %v559
    %v660 = vpack.c.b16 %v564, %v560
    %v661 = vpack.c.b16 %v565, %v561
    %v662 = vpack.c.b16 %v570, %v566
    %v663 = vpack.c.b16 %v571, %v567
    %v664 = vpack.c.b16 %v572, %v568
    %v665 = vpack.c.b16 %v573, %v569
    %v666 = vpack.c.b16 %v578, %v574
    %v667 = vpack.c.b16 %v579, %v575
    %v668 = vpack.c.b16 %v580, %v576
    %v669 = vpack.c.b16 %v581, %v577
    %v670 = vpack.c.b16 %v586, %v582
    %v671 = vpack.c.b16 %v587, %v583
    %v672 = vpack.c.b16 %v588, %v584
    %v673 = vpack.c.b16 %v589, %v585
    %v674 = vpack.c.b16 %v594, %v590
    %v675 = vpack.c.b16 %v595, %v591
    %v676 = vpack.c.b16 %v596, %v592
    %v677 = vpack.c.b16 %v597, %v593
    %v678 = vpack.c.b16 %v602, %v598
    %v679 = vpack.c.b16 %v603, %v599
    %v680 = vpack.c.b16 %v604, %v600
    %v681 = vpack.c.b16 %v605, %v601
    %v682 = vpack.c.b16 %v610, %v606
    %v683 = vpack.c.b16 %v611, %v607
    %v684 = vpack.c.b16 %v612, %v608
    %v685 = vpack.c.b16 %v613, %v609
    %v686 = vpack.c.b16 %v618, %v614
    %v687 = vpack.c.b16 %v619, %v615
    %v688 = vpack.c.b16 %v620, %v616
    %v689 = vpack.c.b16 %v621, %v617
    %v690 = vpack.c.b16 %v626, %v622
    %v691 = vpack.c.b16 %v627, %v623
    %v692 = vpack.c.b16 %v628, %v624
    %v693 = vpack.c.b16 %v629, %v625
    %758 = vmatprep.subr.bf16.mxu0 %v631
    %759 = vmatpush1.bf16.msra.mxu0 %v630
    %760 = vmatprep.subr.bf16.mxu0 %v635
    %761 = vmatpush1.bf16.msra.mxu0 %v634
    %762 = vmatprep.subr.bf16.mxu0 %v639
    %763 = vmatpush1.bf16.msra.mxu0 %v638
    %764 = vmatprep.subr.bf16.mxu0 %v643
    %765 = vmatpush1.bf16.msra.mxu0 %v642
    %766 = vmatprep.subr.bf16.mxu0 %v647
    %767 = vmatpush1.bf16.msra.mxu0 %v646
    %768 = vmatprep.subr.bf16.mxu0 %v651
    %769 = vmatpush1.bf16.msra.mxu0 %v650
    %770 = vmatprep.subr.bf16.mxu0 %v655
    %771 = vmatpush1.bf16.msra.mxu0 %v654
    %772 = vmatprep.subr.bf16.mxu0 %v659
    %773 = vmatpush1.bf16.msra.mxu0 %v658
    %774 = vmatprep.subr.bf16.mxu0 %v663
    %775 = vmatpush1.bf16.msra.mxu0 %v662
    %776 = vmatprep.subr.bf16.mxu0 %v667
    %777 = vmatpush1.bf16.msra.mxu0 %v666
    %778 = vmatprep.subr.bf16.mxu0 %v671
    %779 = vmatpush1.bf16.msra.mxu0 %v670
    %780 = vmatprep.subr.bf16.mxu0 %v675
    %781 = vmatpush1.bf16.msra.mxu0 %v674
    %782 = vmatprep.subr.bf16.mxu0 %v679
    %783 = vmatpush1.bf16.msra.mxu0 %v678
    %784 = vmatprep.subr.bf16.mxu0 %v683
    %785 = vmatpush1.bf16.msra.mxu0 %v682
    %786 = vmatprep.subr.bf16.mxu0 %v687
    %787 = vmatpush1.bf16.msra.mxu0 %v686
    %788 = vmatprep.subr.bf16.mxu0 %v691
    %789 = vmatpush1.bf16.msra.mxu0 %v690
    %790 = vmatprep.mubr.bf16.mxu0 %v351
    %791 = vmatmul.mubr.bf16.gmra.mrb[0].mxu0 %v350
    %v792 = vpop.f32.mrb[0].mxu0
    %v793 = vadd.f32 %v421, %v792
    %v794 = vpop.f32.mrb[0].mxu0
    %v795 = vadd.f32 %v425, %v794
    %v796 = vpop.f32.mrb[0].mxu0
    %v797 = vpop.f32.mrb[0].mxu0
    %798 = vdwg.mxu0
    %799 = vmatprep.subr.bf16.mxu0 %v633
    %800 = vmatpush1.bf16.msra.mxu0 %v632
    %801 = vmatprep.subr.bf16.mxu0 %v637
    %802 = vmatpush1.bf16.msra.mxu0 %v636
    %803 = vmatprep.subr.bf16.mxu0 %v641
    %804 = vmatpush1.bf16.msra.mxu0 %v640
    %805 = vmatprep.subr.bf16.mxu0 %v645
    %806 = vmatpush1.bf16.msra.mxu0 %v644
    %807 = vmatprep.subr.bf16.mxu0 %v649
    %808 = vmatpush1.bf16.msra.mxu0 %v648
    %809 = vmatprep.subr.bf16.mxu0 %v653
    %810 = vmatpush1.bf16.msra.mxu0 %v652
    %811 = vmatprep.subr.bf16.mxu0 %v657
    %812 = vmatpush1.bf16.msra.mxu0 %v656
    %813 = vmatprep.subr.bf16.mxu0 %v661
    %814 = vmatpush1.bf16.msra.mxu0 %v660
    %815 = vmatprep.subr.bf16.mxu0 %v665
    %816 = vmatpush1.bf16.msra.mxu0 %v664
    %817 = vmatprep.subr.bf16.mxu0 %v669
    %818 = vmatpush1.bf16.msra.mxu0 %v668
    %819 = vmatprep.subr.bf16.mxu0 %v673
    %820 = vmatpush1.bf16.msra.mxu0 %v672
    %821 = vmatprep.subr.bf16.mxu0 %v677
    %822 = vmatpush1.bf16.msra.mxu0 %v676
    %823 = vmatprep.subr.bf16.mxu0 %v681
    %824 = vmatpush1.bf16.msra.mxu0 %v680
    %825 = vmatprep.subr.bf16.mxu0 %v685
    %826 = vmatpush1.bf16.msra.mxu0 %v684
    %827 = vmatprep.subr.bf16.mxu0 %v689
    %828 = vmatpush1.bf16.msra.mxu0 %v688
    %829 = vmatprep.subr.bf16.mxu0 %v693
    %830 = vmatpush1.bf16.msra.mxu0 %v692
    %831 = vmatprep.mubr.bf16.mxu0 %v351
    %832 = vmatmul.mubr.bf16.gmra.mrb[0].mxu0 %v350
    %v833 = vpop.f32.mrb[0].mxu0
    %v834 = vadd.f32 %v429, %v833
    %v835 = vpop.f32.mrb[0].mxu0
    %v836 = vadd.f32 %v433, %v835
    %v837 = vpop.f32.mrb[0].mxu0
    %v838 = vpop.f32.mrb[0].mxu0
    %839 = vdwg.mxu0
    %v840 = vmul.f32 %v793, 0.5
    %v841 = vmul.f32 %v795, 0.5
    %v842 = vmul.f32 %v834, 0.5
    %v843 = vmul.f32 %v836, 0.5
    %v844 = vmul.f32 %v793, 0.70710677
    %v845 = vmul.f32 %v795, 0.70710677
    %v846 = vmul.f32 %v834, 0.70710677
    %v847 = vmul.f32 %v836, 0.70710677
    %v848 = verf.f32.pop %v844
    %v849 = verf.f32.pop %v845
    %v850 = verf.f32.pop %v846
    %v851 = verf.f32.pop %v847
    %v852 = vadd.f32 %v848, 1.0
    %v853 = vadd.f32 %v849, 1.0
    %v854 = vadd.f32 %v850, 1.0
    %v855 = vadd.f32 %v851, 1.0
    %v856 = vmul.f32 %v840, %v852
    %v857 = vmul.f32 %v841, %v853
    %v858 = vmul.f32 %v842, %v854
    %v859 = vmul.f32 %v843, %v855
    %v860 = vpack.c.bf16 %v856, %v856
    %v861 = vpack.c.bf16 %v857, %v857
    %v862 = vpack.c.bf16 %v858, %v858
    %v863 = vpack.c.bf16 %v859, %v859
    %v864 = vld [vmem:[#allocation10] sm:$0xff]
    %v865 = vld [vmem:[#allocation10 + $0x8] sm:$0xff]
    %v866 = vld [vmem:[#allocation10 + $0x10] sm:$0xff]
    %v867 = vld [vmem:[#allocation10 + $0x18] sm:$0xf]
    %v868 = vld [vmem:[#allocation10 + $0x1c] sm:$0xff]
    %v869 = vld [vmem:[#allocation10 + $0x24] sm:$0xff]
    %v870 = vld [vmem:[#allocation10 + $0x2c] sm:$0xff]
    %v871 = vld [vmem:[#allocation10 + $0x34] sm:$0xf]
    %v872 = vld [vmem:[#allocation10 + $0x38] sm:$0xff]
    %v873 = vld [vmem:[#allocation10 + $0x40] sm:$0xff]
    %v874 = vld [vmem:[#allocation10 + $0x48] sm:$0xff]
    %v875 = vld [vmem:[#allocation10 + $0x50] sm:$0xf]
    %v876 = vld [vmem:[#allocation10 + $0x54] sm:$0xff]
    %v877 = vld [vmem:[#allocation10 + $0x5c] sm:$0xff]
    %v878 = vld [vmem:[#allocation10 + $0x64] sm:$0xff]
    %v879 = vld [vmem:[#allocation10 + $0x6c] sm:$0xf]
    %v880 = vld [vmem:[#allocation10 + $0x70] sm:$0xff]
    %v881 = vld [vmem:[#allocation10 + $0x78] sm:$0xff]
    %v882 = vld [vmem:[#allocation10 + $0x80] sm:$0xff]
    %v883 = vld [vmem:[#allocation10 + $0x88] sm:$0xf]
    %v884 = vld [vmem:[#allocation10 + $0x8c] sm:$0xff]
    %v885 = vld [vmem:[#allocation10 + $0x94] sm:$0xff]
    %v886 = vld [vmem:[#allocation10 + $0x9c] sm:$0xff]
    %v887 = vld [vmem:[#allocation10 + $0xa4] sm:$0xf]
    %v888 = vld [vmem:[#allocation10 + $0xa8] sm:$0xff]
    %v889 = vld [vmem:[#allocation10 + $0xb0] sm:$0xff]
    %v890 = vld [vmem:[#allocation10 + $0xb8] sm:$0xff]
    %v891 = vld [vmem:[#allocation10 + $0xc0] sm:$0xf]
    %v892 = vld [vmem:[#allocation10 + $0xc4] sm:$0xff]
    %v893 = vld [vmem:[#allocation10 + $0xcc] sm:$0xff]
    %v894 = vld [vmem:[#allocation10 + $0xd4] sm:$0xff]
    %v895 = vld [vmem:[#allocation10 + $0xdc] sm:$0xf]
    %v896 = vld [vmem:[#allocation10 + $0xe0] sm:$0xff]
    %v897 = vld [vmem:[#allocation10 + $0xe8] sm:$0xff]
    %v898 = vld [vmem:[#allocation10 + $0xf0] sm:$0xff]
    %v899 = vld [vmem:[#allocation10 + $0xf8] sm:$0xf]
    %v900 = vld [vmem:[#allocation10 + $0xfc] sm:$0xff]
    %v901 = vld [vmem:[#allocation10 + $0x104] sm:$0xff]
    %v902 = vld [vmem:[#allocation10 + $0x10c] sm:$0xff]
    %v903 = vld [vmem:[#allocation10 + $0x114] sm:$0xf]
    %v904 = vld [vmem:[#allocation10 + $0x118] sm:$0xff]
    %v905 = vld [vmem:[#allocation10 + $0x120] sm:$0xff]
    %v906 = vld [vmem:[#allocation10 + $0x128] sm:$0xff]
    %v907 = vld [vmem:[#allocation10 + $0x130] sm:$0xf]
    %v908 = vld [vmem:[#allocation10 + $0x134] sm:$0xff]
    %v909 = vld [vmem:[#allocation10 + $0x13c] sm:$0xff]
    %v910 = vld [vmem:[#allocation10 + $0x144] sm:$0xff]
    %v911 = vld [vmem:[#allocation10 + $0x14c] sm:$0xf]
    %v912 = vld [vmem:[#allocation10 + $0x150] sm:$0xff]
    %v913 = vld [vmem:[#allocation10 + $0x158] sm:$0xff]
    %v914 = vld [vmem:[#allocation10 + $0x160] sm:$0xff]
    %v915 = vld [vmem:[#allocation10 + $0x168] sm:$0xf]
    %v916 = vld [vmem:[#allocation10 + $0x16c] sm:$0xff]
    %v917 = vld [vmem:[#allocation10 + $0x174] sm:$0xff]
    %v918 = vld [vmem:[#allocation10 + $0x17c] sm:$0xff]
    %v919 = vld [vmem:[#allocation10 + $0x184] sm:$0xf]
    %v920 = vld [vmem:[#allocation10 + $0x188] sm:$0xff]
    %v921 = vld [vmem:[#allocation10 + $0x190] sm:$0xff]
    %v922 = vld [vmem:[#allocation10 + $0x198] sm:$0xff]
    %v923 = vld [vmem:[#allocation10 + $0x1a0] sm:$0xf]
    %v924 = vld [vmem:[#allocation10 + $0x1a4] sm:$0xff]
    %v925 = vld [vmem:[#allocation10 + $0x1ac] sm:$0xff]
    %v926 = vld [vmem:[#allocation10 + $0x1b4] sm:$0xff]
    %v927 = vld [vmem:[#allocation10 + $0x1bc] sm:$0xf]
    %v928 = vld [vmem:[#allocation10 + $0x1c0] sm:$0xff]
    %v929 = vld [vmem:[#allocation10 + $0x1c8] sm:$0xff]
    %v930 = vld [vmem:[#allocation10 + $0x1d0] sm:$0xff]
    %v931 = vld [vmem:[#allocation10 + $0x1d8] sm:$0xf]
    %v932 = vld [vmem:[#allocation10 + $0x1dc] sm:$0xff]
    %v933 = vld [vmem:[#allocation10 + $0x1e4] sm:$0xff]
    %v934 = vld [vmem:[#allocation10 + $0x1ec] sm:$0xff]
    %v935 = vld [vmem:[#allocation10 + $0x1f4] sm:$0xf]
    %v936 = vld [vmem:[#allocation10 + $0x1f8] sm:$0xff]
    %v937 = vld [vmem:[#allocation10 + $0x200] sm:$0xff]
    %v938 = vld [vmem:[#allocation10 + $0x208] sm:$0xff]
    %v939 = vld [vmem:[#allocation10 + $0x210] sm:$0xf]
    %v940 = vld [vmem:[#allocation10 + $0x214] sm:$0xff]
    %v941 = vld [vmem:[#allocation10 + $0x21c] sm:$0xff]
    %v942 = vld [vmem:[#allocation10 + $0x224] sm:$0xff]
    %v943 = vld [vmem:[#allocation10 + $0x22c] sm:$0xf]
    %v944 = vld [vmem:[#allocation10 + $0x230] sm:$0xff]
    %v945 = vld [vmem:[#allocation10 + $0x238] sm:$0xff]
    %v946 = vld [vmem:[#allocation10 + $0x240] sm:$0xff]
    %v947 = vld [vmem:[#allocation10 + $0x248] sm:$0xf]
    %v948 = vld [vmem:[#allocation10 + $0x24c] sm:$0xff]
    %v949 = vld [vmem:[#allocation10 + $0x254] sm:$0xff]
    %v950 = vld [vmem:[#allocation10 + $0x25c] sm:$0xff]
    %v951 = vld [vmem:[#allocation10 + $0x264] sm:$0xf]
    %v952 = vld [vmem:[#allocation10 + $0x268] sm:$0xff]
    %v953 = vld [vmem:[#allocation10 + $0x270] sm:$0xff]
    %v954 = vld [vmem:[#allocation10 + $0x278] sm:$0xff]
    %v955 = vld [vmem:[#allocation10 + $0x280] sm:$0xf]
    %v956 = vld [vmem:[#allocation10 + $0x284] sm:$0xff]
    %v957 = vld [vmem:[#allocation10 + $0x28c] sm:$0xff]
    %v958 = vld [vmem:[#allocation10 + $0x294] sm:$0xff]
    %v959 = vld [vmem:[#allocation10 + $0x29c] sm:$0xf]
    %v960 = vld [vmem:[#allocation10 + $0x2a0] sm:$0xff]
    %v961 = vld [vmem:[#allocation10 + $0x2a8] sm:$0xff]
    %v962 = vld [vmem:[#allocation10 + $0x2b0] sm:$0xff]
    %v963 = vld [vmem:[#allocation10 + $0x2b8] sm:$0xf]
    %v964 = vld [vmem:[#allocation10 + $0x2bc] sm:$0xff]
    %v965 = vld [vmem:[#allocation10 + $0x2c4] sm:$0xff]
    %v966 = vld [vmem:[#allocation10 + $0x2cc] sm:$0xff]
    %v967 = vld [vmem:[#allocation10 + $0x2d4] sm:$0xf]
    %v968 = vld [vmem:[#allocation10 + $0x2d8] sm:$0xff]
    %v969 = vld [vmem:[#allocation10 + $0x2e0] sm:$0xff]
    %v970 = vld [vmem:[#allocation10 + $0x2e8] sm:$0xff]
    %v971 = vld [vmem:[#allocation10 + $0x2f0] sm:$0xf]
    %v972 = vld [vmem:[#allocation10 + $0x2f4] sm:$0xff]
    %v973 = vld [vmem:[#allocation10 + $0x2fc] sm:$0xff]
    %v974 = vld [vmem:[#allocation10 + $0x304] sm:$0xff]
    %v975 = vld [vmem:[#allocation10 + $0x30c] sm:$0xf]
    %v976 = vld [vmem:[#allocation10 + $0x310] sm:$0xff]
    %v977 = vld [vmem:[#allocation10 + $0x318] sm:$0xff]
    %v978 = vld [vmem:[#allocation10 + $0x320] sm:$0xff]
    %v979 = vld [vmem:[#allocation10 + $0x328] sm:$0xf]
    %v980 = vld [vmem:[#allocation10 + $0x32c] sm:$0xff]
    %v981 = vld [vmem:[#allocation10 + $0x334] sm:$0xff]
    %v982 = vld [vmem:[#allocation10 + $0x33c] sm:$0xff]
    %v983 = vld [vmem:[#allocation10 + $0x344] sm:$0xf]
    %v984 = vld [vmem:[#allocation10 + $0x348] sm:$0xff]
    %v985 = vld [vmem:[#allocation10 + $0x350] sm:$0xff]
    %v986 = vld [vmem:[#allocation10 + $0x358] sm:$0xff]
    %v987 = vld [vmem:[#allocation10 + $0x360] sm:$0xf]
    %v988 = vld [vmem:[#allocation10 + $0x364] sm:$0xff]
    %v989 = vld [vmem:[#allocation10 + $0x36c] sm:$0xff]
    %v990 = vld [vmem:[#allocation10 + $0x374] sm:$0xff]
    %v991 = vld [vmem:[#allocation10 + $0x37c] sm:$0xf]
    %v992 = vld [vmem:[#allocation10 + $0x380] sm:$0xff]
    %v993 = vld [vmem:[#allocation10 + $0x388] sm:$0xff]
    %v994 = vld [vmem:[#allocation10 + $0x390] sm:$0xff]
    %v995 = vld [vmem:[#allocation10 + $0x398] sm:$0xf]
    %v996 = vld [vmem:[#allocation10 + $0x39c] sm:$0xff]
    %v997 = vld [vmem:[#allocation10 + $0x3a4] sm:$0xff]
    %v998 = vld [vmem:[#allocation10 + $0x3ac] sm:$0xff]
    %v999 = vld [vmem:[#allocation10 + $0x3b4] sm:$0xf]
    %v1000 = vld [vmem:[#allocation10 + $0x3b8] sm:$0xff]
    %v1001 = vld [vmem:[#allocation10 + $0x3c0] sm:$0xff]
    %v1002 = vld [vmem:[#allocation10 + $0x3c8] sm:$0xff]
    %v1003 = vld [vmem:[#allocation10 + $0x3d0] sm:$0xf]
    %v1004 = vld [vmem:[#allocation10 + $0x3d4] sm:$0xff]
    %v1005 = vld [vmem:[#allocation10 + $0x3dc] sm:$0xff]
    %v1006 = vld [vmem:[#allocation10 + $0x3e4] sm:$0xff]
    %v1007 = vld [vmem:[#allocation10 + $0x3ec] sm:$0xf]
    %v1008 = vld [vmem:[#allocation10 + $0x3f0] sm:$0xff]
    %v1009 = vld [vmem:[#allocation10 + $0x3f8] sm:$0xff]
    %v1010 = vld [vmem:[#allocation10 + $0x400] sm:$0xff]
    %v1011 = vld [vmem:[#allocation10 + $0x408] sm:$0xf]
    %v1012 = vld [vmem:[#allocation10 + $0x40c] sm:$0xff]
    %v1013 = vld [vmem:[#allocation10 + $0x414] sm:$0xff]
    %v1014 = vld [vmem:[#allocation10 + $0x41c] sm:$0xff]
    %v1015 = vld [vmem:[#allocation10 + $0x424] sm:$0xf]
    %v1016 = vld [vmem:[#allocation10 + $0x428] sm:$0xff]
    %v1017 = vld [vmem:[#allocation10 + $0x430] sm:$0xff]
    %v1018 = vld [vmem:[#allocation10 + $0x438] sm:$0xff]
    %v1019 = vld [vmem:[#allocation10 + $0x440] sm:$0xf]
    %v1020 = vld [vmem:[#allocation10 + $0x444] sm:$0xff]
    %v1021 = vld [vmem:[#allocation10 + $0x44c] sm:$0xff]
    %v1022 = vld [vmem:[#allocation10 + $0x454] sm:$0xff]
    %v1023 = vld [vmem:[#allocation10 + $0x45c] sm:$0xf]
    %v1024 = vld [vmem:[#allocation10 + $0x460] sm:$0xff]
    %v1025 = vld [vmem:[#allocation10 + $0x468] sm:$0xff]
    %v1026 = vld [vmem:[#allocation10 + $0x470] sm:$0xff]
    %v1027 = vld [vmem:[#allocation10 + $0x478] sm:$0xf]
    %v1028 = vld [vmem:[#allocation10 + $0x47c] sm:$0xff]
    %v1029 = vld [vmem:[#allocation10 + $0x484] sm:$0xff]
    %v1030 = vld [vmem:[#allocation10 + $0x48c] sm:$0xff]
    %v1031 = vld [vmem:[#allocation10 + $0x494] sm:$0xf]
    %v1032 = vld [vmem:[#allocation10 + $0x498] sm:$0xff]
    %v1033 = vld [vmem:[#allocation10 + $0x4a0] sm:$0xff]
    %v1034 = vld [vmem:[#allocation10 + $0x4a8] sm:$0xff]
    %v1035 = vld [vmem:[#allocation10 + $0x4b0] sm:$0xf]
    %v1036 = vld [vmem:[#allocation10 + $0x4b4] sm:$0xff]
    %v1037 = vld [vmem:[#allocation10 + $0x4bc] sm:$0xff]
    %v1038 = vld [vmem:[#allocation10 + $0x4c4] sm:$0xff]
    %v1039 = vld [vmem:[#allocation10 + $0x4cc] sm:$0xf]
    %v1040 = vld [vmem:[#allocation10 + $0x4d0] sm:$0xff]
    %v1041 = vld [vmem:[#allocation10 + $0x4d8] sm:$0xff]
    %v1042 = vld [vmem:[#allocation10 + $0x4e0] sm:$0xff]
    %v1043 = vld [vmem:[#allocation10 + $0x4e8] sm:$0xf]
    %v1044 = vld [vmem:[#allocation10 + $0x4ec] sm:$0xff]
    %v1045 = vld [vmem:[#allocation10 + $0x4f4] sm:$0xff]
    %v1046 = vld [vmem:[#allocation10 + $0x4fc] sm:$0xff]
    %v1047 = vld [vmem:[#allocation10 + $0x504] sm:$0xf]
    %v1048 = vld [vmem:[#allocation10 + $0x508] sm:$0xff]
    %v1049 = vld [vmem:[#allocation10 + $0x510] sm:$0xff]
    %v1050 = vld [vmem:[#allocation10 + $0x518] sm:$0xff]
    %v1051 = vld [vmem:[#allocation10 + $0x520] sm:$0xf]
    %v1052 = vld [vmem:[#allocation10 + $0x524] sm:$0xff]
    %v1053 = vld [vmem:[#allocation10 + $0x52c] sm:$0xff]
    %v1054 = vld [vmem:[#allocation10 + $0x534] sm:$0xff]
    %v1055 = vld [vmem:[#allocation10 + $0x53c] sm:$0xf]
    %v1056 = vld [vmem:[#allocation10 + $0x540] sm:$0xff]
    %v1057 = vld [vmem:[#allocation10 + $0x548] sm:$0xff]
    %v1058 = vld [vmem:[#allocation10 + $0x550] sm:$0xff]
    %v1059 = vld [vmem:[#allocation10 + $0x558] sm:$0xf]
    %v1060 = vld [vmem:[#allocation10 + $0x55c] sm:$0xff]
    %v1061 = vld [vmem:[#allocation10 + $0x564] sm:$0xff]
    %v1062 = vld [vmem:[#allocation10 + $0x56c] sm:$0xff]
    %v1063 = vld [vmem:[#allocation10 + $0x574] sm:$0xf]
    %v1064 = vld [vmem:[#allocation10 + $0x578] sm:$0xff]
    %v1065 = vld [vmem:[#allocation10 + $0x580] sm:$0xff]
    %v1066 = vld [vmem:[#allocation10 + $0x588] sm:$0xff]
    %v1067 = vld [vmem:[#allocation10 + $0x590] sm:$0xf]
    %v1068 = vld [vmem:[#allocation10 + $0x594] sm:$0xff]
    %v1069 = vld [vmem:[#allocation10 + $0x59c] sm:$0xff]
    %v1070 = vld [vmem:[#allocation10 + $0x5a4] sm:$0xff]
    %v1071 = vld [vmem:[#allocation10 + $0x5ac] sm:$0xf]
    %v1072 = vld [vmem:[#allocation10 + $0x5b0] sm:$0xff]
    %v1073 = vld [vmem:[#allocation10 + $0x5b8] sm:$0xff]
    %v1074 = vld [vmem:[#allocation10 + $0x5c0] sm:$0xff]
    %v1075 = vld [vmem:[#allocation10 + $0x5c8] sm:$0xf]
    %v1076 = vld [vmem:[#allocation10 + $0x5cc] sm:$0xff]
    %v1077 = vld [vmem:[#allocation10 + $0x5d4] sm:$0xff]
    %v1078 = vld [vmem:[#allocation10 + $0x5dc] sm:$0xff]
    %v1079 = vld [vmem:[#allocation10 + $0x5e4] sm:$0xf]
    %v1080 = vld [vmem:[#allocation10 + $0x5e8] sm:$0xff]
    %v1081 = vld [vmem:[#allocation10 + $0x5f0] sm:$0xff]
    %v1082 = vld [vmem:[#allocation10 + $0x5f8] sm:$0xff]
    %v1083 = vld [vmem:[#allocation10 + $0x600] sm:$0xf]
    %v1084 = vld [vmem:[#allocation10 + $0x604] sm:$0xff]
    %v1085 = vld [vmem:[#allocation10 + $0x60c] sm:$0xff]
    %v1086 = vld [vmem:[#allocation10 + $0x614] sm:$0xff]
    %v1087 = vld [vmem:[#allocation10 + $0x61c] sm:$0xf]
    %v1088 = vld [vmem:[#allocation10 + $0x620] sm:$0xff]
    %v1089 = vld [vmem:[#allocation10 + $0x628] sm:$0xff]
    %v1090 = vld [vmem:[#allocation10 + $0x630] sm:$0xff]
    %v1091 = vld [vmem:[#allocation10 + $0x638] sm:$0xf]
    %v1092 = vld [vmem:[#allocation10 + $0x63c] sm:$0xff]
    %v1093 = vld [vmem:[#allocation10 + $0x644] sm:$0xff]
    %v1094 = vld [vmem:[#allocation10 + $0x64c] sm:$0xff]
    %v1095 = vld [vmem:[#allocation10 + $0x654] sm:$0xf]
    %v1096 = vld [vmem:[#allocation10 + $0x658] sm:$0xff]
    %v1097 = vld [vmem:[#allocation10 + $0x660] sm:$0xff]
    %v1098 = vld [vmem:[#allocation10 + $0x668] sm:$0xff]
    %v1099 = vld [vmem:[#allocation10 + $0x670] sm:$0xf]
    %v1100 = vld [vmem:[#allocation10 + $0x674] sm:$0xff]
    %v1101 = vld [vmem:[#allocation10 + $0x67c] sm:$0xff]
    %v1102 = vld [vmem:[#allocation10 + $0x684] sm:$0xff]
    %v1103 = vld [vmem:[#allocation10 + $0x68c] sm:$0xf]
    %v1104 = vld [vmem:[#allocation10 + $0x690] sm:$0xff]
    %v1105 = vld [vmem:[#allocation10 + $0x698] sm:$0xff]
    %v1106 = vld [vmem:[#allocation10 + $0x6a0] sm:$0xff]
    %v1107 = vld [vmem:[#allocation10 + $0x6a8] sm:$0xf]
    %v1108 = vld [vmem:[#allocation10 + $0x6ac] sm:$0xff]
    %v1109 = vld [vmem:[#allocation10 + $0x6b4] sm:$0xff]
    %v1110 = vld [vmem:[#allocation10 + $0x6bc] sm:$0xff]
    %v1111 = vld [vmem:[#allocation10 + $0x6c4] sm:$0xf]
    %v1112 = vld [vmem:[#allocation10 + $0x6c8] sm:$0xff]
    %v1113 = vld [vmem:[#allocation10 + $0x6d0] sm:$0xff]
    %v1114 = vld [vmem:[#allocation10 + $0x6d8] sm:$0xff]
    %v1115 = vld [vmem:[#allocation10 + $0x6e0] sm:$0xf]
    %v1116 = vld [vmem:[#allocation10 + $0x6e4] sm:$0xff]
    %v1117 = vld [vmem:[#allocation10 + $0x6ec] sm:$0xff]
    %v1118 = vld [vmem:[#allocation10 + $0x6f4] sm:$0xff]
    %v1119 = vld [vmem:[#allocation10 + $0x6fc] sm:$0xf]
    %v1120 = vld [vmem:[%s8] sm:$0xff]
    %v1122 = vlaneseq
    %v1123 = vshrl.u32 %v1122, 7
    %v1124 = vsub.s32 0, %v1123
    %v1125 = vrot.slane %v1120, %v1124
    %v1126 = vlaneseq
    %v1127 = vshrl.u32 %v1126, 7
    %v1128 = vsub.s32 1, %v1127
    %v1129 = vrot.slane %v1120, %v1128
    %v1130 = vlaneseq
    %v1131 = vshrl.u32 %v1130, 7
    %v1132 = vsub.s32 2, %v1131
    %v1133 = vrot.slane %v1120, %v1132
    %v1134 = vlaneseq
    %v1135 = vshrl.u32 %v1134, 7
    %v1136 = vsub.s32 3, %v1135
    %v1137 = vrot.slane %v1120, %v1136
    %v1138 = vlaneseq
    %v1139 = vshrl.u32 %v1138, 7
    %v1140 = vsub.s32 4, %v1139
    %v1141 = vrot.slane %v1120, %v1140
    %v1142 = vlaneseq
    %v1143 = vshrl.u32 %v1142, 7
    %v1144 = vsub.s32 5, %v1143
    %v1145 = vrot.slane %v1120, %v1144
    %v1146 = vlaneseq
    %v1147 = vshrl.u32 %v1146, 7
    %v1148 = vsub.s32 6, %v1147
    %v1149 = vrot.slane %v1120, %v1148
    %v1413 = vunpack.c.l.b16 %v864
    %v1414 = vunpack.c.h.b16 %v864
    %v1415 = vunpack.c.l.b16 %v865
    %v1416 = vunpack.c.h.b16 %v865
    %v1417 = vunpack.c.l.b16 %v866
    %v1418 = vunpack.c.h.b16 %v866
    %v1419 = vunpack.c.l.b16 %v867
    %v1420 = vunpack.c.l.b16 %v868
    %v1421 = vunpack.c.h.b16 %v868
    %v1422 = vunpack.c.l.b16 %v869
    %v1423 = vunpack.c.h.b16 %v869
    %v1424 = vunpack.c.l.b16 %v870
    %v1425 = vunpack.c.h.b16 %v870
    %v1426 = vunpack.c.l.b16 %v871
    %v1427 = vunpack.c.l.b16 %v872
    %v1428 = vunpack.c.h.b16 %v872
    %v1429 = vunpack.c.l.b16 %v873
    %v1430 = vunpack.c.h.b16 %v873
    %v1431 = vunpack.c.l.b16 %v874
    %v1432 = vunpack.c.h.b16 %v874
    %v1433 = vunpack.c.l.b16 %v875
    %v1434 = vunpack.c.l.b16 %v876
    %v1435 = vunpack.c.h.b16 %v876
    %v1436 = vunpack.c.l.b16 %v877
    %v1437 = vunpack.c.h.b16 %v877
    %v1438 = vunpack.c.l.b16 %v878
    %v1439 = vunpack.c.h.b16 %v878
    %v1440 = vunpack.c.l.b16 %v879
    %v1441 = vunpack.c.l.b16 %v880
    %v1442 = vunpack.c.h.b16 %v880
    %v1443 = vunpack.c.l.b16 %v881
    %v1444 = vunpack.c.h.b16 %v881
    %v1445 = vunpack.c.l.b16 %v882
    %v1446 = vunpack.c.h.b16 %v882
    %v1447 = vunpack.c.l.b16 %v883
    %v1448 = vunpack.c.l.b16 %v884
    %v1449 = vunpack.c.h.b16 %v884
    %v1450 = vunpack.c.l.b16 %v885
    %v1451 = vunpack.c.h.b16 %v885
    %v1452 = vunpack.c.l.b16 %v886
    %v1453 = vunpack.c.h.b16 %v886
    %v1454 = vunpack.c.l.b16 %v887
    %v1455 = vunpack.c.l.b16 %v888
    %v1456 = vunpack.c.h.b16 %v888
    %v1457 = vunpack.c.l.b16 %v889
    %v1458 = vunpack.c.h.b16 %v889
    %v1459 = vunpack.c.l.b16 %v890
    %v1460 = vunpack.c.h.b16 %v890
    %v1461 = vunpack.c.l.b16 %v891
    %v1462 = vunpack.c.l.b16 %v892
    %v1463 = vunpack.c.h.b16 %v892
    %v1464 = vunpack.c.l.b16 %v893
    %v1465 = vunpack.c.h.b16 %v893
    %v1466 = vunpack.c.l.b16 %v894
    %v1467 = vunpack.c.h.b16 %v894
    %v1468 = vunpack.c.l.b16 %v895
    %v1469 = vunpack.c.l.b16 %v896
    %v1470 = vunpack.c.h.b16 %v896
    %v1471 = vunpack.c.l.b16 %v897
    %v1472 = vunpack.c.h.b16 %v897
    %v1473 = vunpack.c.l.b16 %v898
    %v1474 = vunpack.c.h.b16 %v898
    %v1475 = vunpack.c.l.b16 %v899
    %v1476 = vunpack.c.l.b16 %v900
    %v1477 = vunpack.c.h.b16 %v900
    %v1478 = vunpack.c.l.b16 %v901
    %v1479 = vunpack.c.h.b16 %v901
    %v1480 = vunpack.c.l.b16 %v902
    %v1481 = vunpack.c.h.b16 %v902
    %v1482 = vunpack.c.l.b16 %v903
    %v1483 = vunpack.c.l.b16 %v904
    %v1484 = vunpack.c.h.b16 %v904
    %v1485 = vunpack.c.l.b16 %v905
    %v1486 = vunpack.c.h.b16 %v905
    %v1487 = vunpack.c.l.b16 %v906
    %v1488 = vunpack.c.h.b16 %v906
    %v1489 = vunpack.c.l.b16 %v907
    %v1490 = vunpack.c.l.b16 %v908
    %v1491 = vunpack.c.h.b16 %v908
    %v1492 = vunpack.c.l.b16 %v909
    %v1493 = vunpack.c.h.b16 %v909
    %v1494 = vunpack.c.l.b16 %v910
    %v1495 = vunpack.c.h.b16 %v910
    %v1496 = vunpack.c.l.b16 %v911
    %v1497 = vunpack.c.l.b16 %v912
    %v1498 = vunpack.c.h.b16 %v912
    %v1499 = vunpack.c.l.b16 %v913
    %v1500 = vunpack.c.h.b16 %v913
    %v1501 = vunpack.c.l.b16 %v914
    %v1502 = vunpack.c.h.b16 %v914
    %v1503 = vunpack.c.l.b16 %v915
    %v1504 = vunpack.c.l.b16 %v916
    %v1505 = vunpack.c.h.b16 %v916
    %v1506 = vunpack.c.l.b16 %v917
    %v1507 = vunpack.c.h.b16 %v917
    %v1508 = vunpack.c.l.b16 %v918
    %v1509 = vunpack.c.h.b16 %v918
    %v1510 = vunpack.c.l.b16 %v919
    %v1511 = vunpack.c.l.b16 %v920
    %v1512 = vunpack.c.h.b16 %v920
    %v1513 = vunpack.c.l.b16 %v921
    %v1514 = vunpack.c.h.b16 %v921
    %v1515 = vunpack.c.l.b16 %v922
    %v1516 = vunpack.c.h.b16 %v922
    %v1517 = vunpack.c.l.b16 %v923
    %v1518 = vunpack.c.l.b16 %v924
    %v1519 = vunpack.c.h.b16 %v924
    %v1520 = vunpack.c.l.b16 %v925
    %v1521 = vunpack.c.h.b16 %v925
    %v1522 = vunpack.c.l.b16 %v926
    %v1523 = vunpack.c.h.b16 %v926
    %v1524 = vunpack.c.l.b16 %v927
    %v1525 = vunpack.c.l.b16 %v928
    %v1526 = vunpack.c.h.b16 %v928
    %v1527 = vunpack.c.l.b16 %v929
    %v1528 = vunpack.c.h.b16 %v929
    %v1529 = vunpack.c.l.b16 %v930
    %v1530 = vunpack.c.h.b16 %v930
    %v1531 = vunpack.c.l.b16 %v931
    %v1532 = vunpack.c.l.b16 %v932
    %v1533 = vunpack.c.h.b16 %v932
    %v1534 = vunpack.c.l.b16 %v933
    %v1535 = vunpack.c.h.b16 %v933
    %v1536 = vunpack.c.l.b16 %v934
    %v1537 = vunpack.c.h.b16 %v934
    %v1538 = vunpack.c.l.b16 %v935
    %v1539 = vunpack.c.l.b16 %v936
    %v1540 = vunpack.c.h.b16 %v936
    %v1541 = vunpack.c.l.b16 %v937
    %v1542 = vunpack.c.h.b16 %v937
    %v1543 = vunpack.c.l.b16 %v938
    %v1544 = vunpack.c.h.b16 %v938
    %v1545 = vunpack.c.l.b16 %v939
    %v1546 = vunpack.c.l.b16 %v940
    %v1547 = vunpack.c.h.b16 %v940
    %v1548 = vunpack.c.l.b16 %v941
    %v1549 = vunpack.c.h.b16 %v941
    %v1550 = vunpack.c.l.b16 %v942
    %v1551 = vunpack.c.h.b16 %v942
    %v1552 = vunpack.c.l.b16 %v943
    %v1553 = vunpack.c.l.b16 %v944
    %v1554 = vunpack.c.h.b16 %v944
    %v1555 = vunpack.c.l.b16 %v945
    %v1556 = vunpack.c.h.b16 %v945
    %v1557 = vunpack.c.l.b16 %v946
    %v1558 = vunpack.c.h.b16 %v946
    %v1559 = vunpack.c.l.b16 %v947
    %v1560 = vunpack.c.l.b16 %v948
    %v1561 = vunpack.c.h.b16 %v948
    %v1562 = vunpack.c.l.b16 %v949
    %v1563 = vunpack.c.h.b16 %v949
    %v1564 = vunpack.c.l.b16 %v950
    %v1565 = vunpack.c.h.b16 %v950
    %v1566 = vunpack.c.l.b16 %v951
    %v1567 = vunpack.c.l.b16 %v952
    %v1568 = vunpack.c.h.b16 %v952
    %v1569 = vunpack.c.l.b16 %v953
    %v1570 = vunpack.c.h.b16 %v953
    %v1571 = vunpack.c.l.b16 %v954
    %v1572 = vunpack.c.h.b16 %v954
    %v1573 = vunpack.c.l.b16 %v955
    %v1574 = vunpack.c.l.b16 %v956
    %v1575 = vunpack.c.h.b16 %v956
    %v1576 = vunpack.c.l.b16 %v957
    %v1577 = vunpack.c.h.b16 %v957
    %v1578 = vunpack.c.l.b16 %v958
    %v1579 = vunpack.c.h.b16 %v958
    %v1580 = vunpack.c.l.b16 %v959
    %v1581 = vunpack.c.l.b16 %v960
    %v1582 = vunpack.c.h.b16 %v960
    %v1583 = vunpack.c.l.b16 %v961
    %v1584 = vunpack.c.h.b16 %v961
    %v1585 = vunpack.c.l.b16 %v962
    %v1586 = vunpack.c.h.b16 %v962
    %v1587 = vunpack.c.l.b16 %v963
    %v1588 = vunpack.c.l.b16 %v964
    %v1589 = vunpack.c.h.b16 %v964
    %v1590 = vunpack.c.l.b16 %v965
    %v1591 = vunpack.c.h.b16 %v965
    %v1592 = vunpack.c.l.b16 %v966
    %v1593 = vunpack.c.h.b16 %v966
    %v1594 = vunpack.c.l.b16 %v967
    %v1595 = vunpack.c.l.b16 %v968
    %v1596 = vunpack.c.h.b16 %v968
    %v1597 = vunpack.c.l.b16 %v969
    %v1598 = vunpack.c.h.b16 %v969
    %v1599 = vunpack.c.l.b16 %v970
    %v1600 = vunpack.c.h.b16 %v970
    %v1601 = vunpack.c.l.b16 %v971
    %v1602 = vunpack.c.l.b16 %v972
    %v1603 = vunpack.c.h.b16 %v972
    %v1604 = vunpack.c.l.b16 %v973
    %v1605 = vunpack.c.h.b16 %v973
    %v1606 = vunpack.c.l.b16 %v974
    %v1607 = vunpack.c.h.b16 %v974
    %v1608 = vunpack.c.l.b16 %v975
    %v1609 = vunpack.c.l.b16 %v976
    %v1610 = vunpack.c.h.b16 %v976
    %v1611 = vunpack.c.l.b16 %v977
    %v1612 = vunpack.c.h.b16 %v977
    %v1613 = vunpack.c.l.b16 %v978
    %v1614 = vunpack.c.h.b16 %v978
    %v1615 = vunpack.c.l.b16 %v979
    %v1616 = vunpack.c.l.b16 %v980
    %v1617 = vunpack.c.h.b16 %v980
    %v1618 = vunpack.c.l.b16 %v981
    %v1619 = vunpack.c.h.b16 %v981
    %v1620 = vunpack.c.l.b16 %v982
    %v1621 = vunpack.c.h.b16 %v982
    %v1622 = vunpack.c.l.b16 %v983
    %v1623 = vunpack.c.l.b16 %v984
    %v1624 = vunpack.c.h.b16 %v984
    %v1625 = vunpack.c.l.b16 %v985
    %v1626 = vunpack.c.h.b16 %v985
    %v1627 = vunpack.c.l.b16 %v986
    %v1628 = vunpack.c.h.b16 %v986
    %v1629 = vunpack.c.l.b16 %v987
    %v1630 = vunpack.c.l.b16 %v988
    %v1631 = vunpack.c.h.b16 %v988
    %v1632 = vunpack.c.l.b16 %v989
    %v1633 = vunpack.c.h.b16 %v989
    %v1634 = vunpack.c.l.b16 %v990
    %v1635 = vunpack.c.h.b16 %v990
    %v1636 = vunpack.c.l.b16 %v991
    %v1637 = vunpack.c.l.b16 %v992
    %v1638 = vunpack.c.h.b16 %v992
    %v1639 = vunpack.c.l.b16 %v993
    %v1640 = vunpack.c.h.b16 %v993
    %v1641 = vunpack.c.l.b16 %v994
    %v1642 = vunpack.c.h.b16 %v994
    %v1643 = vunpack.c.l.b16 %v995
    %v1644 = vunpack.c.l.b16 %v996
    %v1645 = vunpack.c.h.b16 %v996
    %v1646 = vunpack.c.l.b16 %v997
    %v1647 = vunpack.c.h.b16 %v997
    %v1648 = vunpack.c.l.b16 %v998
    %v1649 = vunpack.c.h.b16 %v998
    %v1650 = vunpack.c.l.b16 %v999
    %v1651 = vunpack.c.l.b16 %v1000
    %v1652 = vunpack.c.h.b16 %v1000
    %v1653 = vunpack.c.l.b16 %v1001
    %v1654 = vunpack.c.h.b16 %v1001
    %v1655 = vunpack.c.l.b16 %v1002
    %v1656 = vunpack.c.h.b16 %v1002
    %v1657 = vunpack.c.l.b16 %v1003
    %v1658 = vunpack.c.l.b16 %v1004
    %v1659 = vunpack.c.h.b16 %v1004
    %v1660 = vunpack.c.l.b16 %v1005
    %v1661 = vunpack.c.h.b16 %v1005
    %v1662 = vunpack.c.l.b16 %v1006
    %v1663 = vunpack.c.h.b16 %v1006
    %v1664 = vunpack.c.l.b16 %v1007
    %v1665 = vunpack.c.l.b16 %v1008
    %v1666 = vunpack.c.h.b16 %v1008
    %v1667 = vunpack.c.l.b16 %v1009
    %v1668 = vunpack.c.h.b16 %v1009
    %v1669 = vunpack.c.l.b16 %v1010
    %v1670 = vunpack.c.h.b16 %v1010
    %v1671 = vunpack.c.l.b16 %v1011
    %v1672 = vunpack.c.l.b16 %v1012
    %v1673 = vunpack.c.h.b16 %v1012
    %v1674 = vunpack.c.l.b16 %v1013
    %v1675 = vunpack.c.h.b16 %v1013
    %v1676 = vunpack.c.l.b16 %v1014
    %v1677 = vunpack.c.h.b16 %v1014
    %v1678 = vunpack.c.l.b16 %v1015
    %v1679 = vunpack.c.l.b16 %v1016
    %v1680 = vunpack.c.h.b16 %v1016
    %v1681 = vunpack.c.l.b16 %v1017
    %v1682 = vunpack.c.h.b16 %v1017
    %v1683 = vunpack.c.l.b16 %v1018
    %v1684 = vunpack.c.h.b16 %v1018
    %v1685 = vunpack.c.l.b16 %v1019
    %v1686 = vunpack.c.l.b16 %v1020
    %v1687 = vunpack.c.h.b16 %v1020
    %v1688 = vunpack.c.l.b16 %v1021
    %v1689 = vunpack.c.h.b16 %v1021
    %v1690 = vunpack.c.l.b16 %v1022
    %v1691 = vunpack.c.h.b16 %v1022
    %v1692 = vunpack.c.l.b16 %v1023
    %v1693 = vunpack.c.l.b16 %v1024
    %v1694 = vunpack.c.h.b16 %v1024
    %v1695 = vunpack.c.l.b16 %v1025
    %v1696 = vunpack.c.h.b16 %v1025
    %v1697 = vunpack.c.l.b16 %v1026
    %v1698 = vunpack.c.h.b16 %v1026
    %v1699 = vunpack.c.l.b16 %v1027
    %v1700 = vunpack.c.l.b16 %v1028
    %v1701 = vunpack.c.h.b16 %v1028
    %v1702 = vunpack.c.l.b16 %v1029
    %v1703 = vunpack.c.h.b16 %v1029
    %v1704 = vunpack.c.l.b16 %v1030
    %v1705 = vunpack.c.h.b16 %v1030
    %v1706 = vunpack.c.l.b16 %v1031
    %v1707 = vunpack.c.l.b16 %v1032
    %v1708 = vunpack.c.h.b16 %v1032
    %v1709 = vunpack.c.l.b16 %v1033
    %v1710 = vunpack.c.h.b16 %v1033
    %v1711 = vunpack.c.l.b16 %v1034
    %v1712 = vunpack.c.h.b16 %v1034
    %v1713 = vunpack.c.l.b16 %v1035
    %v1714 = vunpack.c.l.b16 %v1036
    %v1715 = vunpack.c.h.b16 %v1036
    %v1716 = vunpack.c.l.b16 %v1037
    %v1717 = vunpack.c.h.b16 %v1037
    %v1718 = vunpack.c.l.b16 %v1038
    %v1719 = vunpack.c.h.b16 %v1038
    %v1720 = vunpack.c.l.b16 %v1039
    %v1721 = vunpack.c.l.b16 %v1040
    %v1722 = vunpack.c.h.b16 %v1040
    %v1723 = vunpack.c.l.b16 %v1041
    %v1724 = vunpack.c.h.b16 %v1041
    %v1725 = vunpack.c.l.b16 %v1042
    %v1726 = vunpack.c.h.b16 %v1042
    %v1727 = vunpack.c.l.b16 %v1043
    %v1728 = vunpack.c.l.b16 %v1044
    %v1729 = vunpack.c.h.b16 %v1044
    %v1730 = vunpack.c.l.b16 %v1045
    %v1731 = vunpack.c.h.b16 %v1045
    %v1732 = vunpack.c.l.b16 %v1046
    %v1733 = vunpack.c.h.b16 %v1046
    %v1734 = vunpack.c.l.b16 %v1047
    %v1735 = vunpack.c.l.b16 %v1048
    %v1736 = vunpack.c.h.b16 %v1048
    %v1737 = vunpack.c.l.b16 %v1049
    %v1738 = vunpack.c.h.b16 %v1049
    %v1739 = vunpack.c.l.b16 %v1050
    %v1740 = vunpack.c.h.b16 %v1050
    %v1741 = vunpack.c.l.b16 %v1051
    %v1742 = vunpack.c.l.b16 %v1052
    %v1743 = vunpack.c.h.b16 %v1052
    %v1744 = vunpack.c.l.b16 %v1053
    %v1745 = vunpack.c.h.b16 %v1053
    %v1746 = vunpack.c.l.b16 %v1054
    %v1747 = vunpack.c.h.b16 %v1054
    %v1748 = vunpack.c.l.b16 %v1055
    %v1749 = vunpack.c.l.b16 %v1056
    %v1750 = vunpack.c.h.b16 %v1056
    %v1751 = vunpack.c.l.b16 %v1057
    %v1752 = vunpack.c.h.b16 %v1057
    %v1753 = vunpack.c.l.b16 %v1058
    %v1754 = vunpack.c.h.b16 %v1058
    %v1755 = vunpack.c.l.b16 %v1059
    %v1756 = vunpack.c.l.b16 %v1060
    %v1757 = vunpack.c.h.b16 %v1060
    %v1758 = vunpack.c.l.b16 %v1061
    %v1759 = vunpack.c.h.b16 %v1061
    %v1760 = vunpack.c.l.b16 %v1062
    %v1761 = vunpack.c.h.b16 %v1062
    %v1762 = vunpack.c.l.b16 %v1063
    %v1763 = vunpack.c.l.b16 %v1064
    %v1764 = vunpack.c.h.b16 %v1064
    %v1765 = vunpack.c.l.b16 %v1065
    %v1766 = vunpack.c.h.b16 %v1065
    %v1767 = vunpack.c.l.b16 %v1066
    %v1768 = vunpack.c.h.b16 %v1066
    %v1769 = vunpack.c.l.b16 %v1067
    %v1770 = vunpack.c.l.b16 %v1068
    %v1771 = vunpack.c.h.b16 %v1068
    %v1772 = vunpack.c.l.b16 %v1069
    %v1773 = vunpack.c.h.b16 %v1069
    %v1774 = vunpack.c.l.b16 %v1070
    %v1775 = vunpack.c.h.b16 %v1070
    %v1776 = vunpack.c.l.b16 %v1071
    %v1777 = vunpack.c.l.b16 %v1072
    %v1778 = vunpack.c.h.b16 %v1072
    %v1779 = vunpack.c.l.b16 %v1073
    %v1780 = vunpack.c.h.b16 %v1073
    %v1781 = vunpack.c.l.b16 %v1074
    %v1782 = vunpack.c.h.b16 %v1074
    %v1783 = vunpack.c.l.b16 %v1075
    %v1784 = vunpack.c.l.b16 %v1076
    %v1785 = vunpack.c.h.b16 %v1076
    %v1786 = vunpack.c.l.b16 %v1077
    %v1787 = vunpack.c.h.b16 %v1077
    %v1788 = vunpack.c.l.b16 %v1078
    %v1789 = vunpack.c.h.b16 %v1078
    %v1790 = vunpack.c.l.b16 %v1079
    %v1791 = vunpack.c.l.b16 %v1080
    %v1792 = vunpack.c.h.b16 %v1080
    %v1793 = vunpack.c.l.b16 %v1081
    %v1794 = vunpack.c.h.b16 %v1081
    %v1795 = vunpack.c.l.b16 %v1082
    %v1796 = vunpack.c.h.b16 %v1082
    %v1797 = vunpack.c.l.b16 %v1083
    %v1798 = vunpack.c.l.b16 %v1084
    %v1799 = vunpack.c.h.b16 %v1084
    %v1800 = vunpack.c.l.b16 %v1085
    %v1801 = vunpack.c.h.b16 %v1085
    %v1802 = vunpack.c.l.b16 %v1086
    %v1803 = vunpack.c.h.b16 %v1086
    %v1804 = vunpack.c.l.b16 %v1087
    %v1805 = vunpack.c.l.b16 %v1088
    %v1806 = vunpack.c.h.b16 %v1088
    %v1807 = vunpack.c.l.b16 %v1089
    %v1808 = vunpack.c.h.b16 %v1089
    %v1809 = vunpack.c.l.b16 %v1090
    %v1810 = vunpack.c.h.b16 %v1090
    %v1811 = vunpack.c.l.b16 %v1091
    %v1812 = vunpack.c.l.b16 %v1092
    %v1813 = vunpack.c.h.b16 %v1092
    %v1814 = vunpack.c.l.b16 %v1093
    %v1815 = vunpack.c.h.b16 %v1093
    %v1816 = vunpack.c.l.b16 %v1094
    %v1817 = vunpack.c.h.b16 %v1094
    %v1818 = vunpack.c.l.b16 %v1095
    %v1819 = vunpack.c.l.b16 %v1096
    %v1820 = vunpack.c.h.b16 %v1096
    %v1821 = vunpack.c.l.b16 %v1097
    %v1822 = vunpack.c.h.b16 %v1097
    %v1823 = vunpack.c.l.b16 %v1098
    %v1824 = vunpack.c.h.b16 %v1098
    %v1825 = vunpack.c.l.b16 %v1099
    %v1826 = vunpack.c.l.b16 %v1100
    %v1827 = vunpack.c.h.b16 %v1100
    %v1828 = vunpack.c.l.b16 %v1101
    %v1829 = vunpack.c.h.b16 %v1101
    %v1830 = vunpack.c.l.b16 %v1102
    %v1831 = vunpack.c.h.b16 %v1102
    %v1832 = vunpack.c.l.b16 %v1103
    %v1833 = vunpack.c.l.b16 %v1104
    %v1834 = vunpack.c.h.b16 %v1104
    %v1835 = vunpack.c.l.b16 %v1105
    %v1836 = vunpack.c.h.b16 %v1105
    %v1837 = vunpack.c.l.b16 %v1106
    %v1838 = vunpack.c.h.b16 %v1106
    %v1839 = vunpack.c.l.b16 %v1107
    %v1840 = vunpack.c.l.b16 %v1108
    %v1841 = vunpack.c.h.b16 %v1108
    %v1842 = vunpack.c.l.b16 %v1109
    %v1843 = vunpack.c.h.b16 %v1109
    %v1844 = vunpack.c.l.b16 %v1110
    %v1845 = vunpack.c.h.b16 %v1110
    %v1846 = vunpack.c.l.b16 %v1111
    %v1847 = vunpack.c.l.b16 %v1112
    %v1848 = vunpack.c.h.b16 %v1112
    %v1849 = vunpack.c.l.b16 %v1113
    %v1850 = vunpack.c.h.b16 %v1113
    %v1851 = vunpack.c.l.b16 %v1114
    %v1852 = vunpack.c.h.b16 %v1114
    %v1853 = vunpack.c.l.b16 %v1115
    %v1854 = vunpack.c.l.b16 %v1116
    %v1855 = vunpack.c.h.b16 %v1116
    %v1856 = vunpack.c.l.b16 %v1117
    %v1857 = vunpack.c.h.b16 %v1117
    %v1858 = vunpack.c.l.b16 %v1118
    %v1859 = vunpack.c.h.b16 %v1118
    %v1860 = vunpack.c.l.b16 %v1119
    %v1861 = vpack.c.b16 %v1420, %v1413
    %v1862 = vpack.c.b16 %v1421, %v1414
    %v1863 = vpack.c.b16 %v1422, %v1415
    %v1864 = vpack.c.b16 %v1423, %v1416
    %v1865 = vpack.c.b16 %v1424, %v1417
    %v1866 = vpack.c.b16 %v1425, %v1418
    %v1867 = vpack.c.b16 %v1426, %v1419
    %v1868 = vpack.c.b16 %v1434, %v1427
    %v1869 = vpack.c.b16 %v1435, %v1428
    %v1870 = vpack.c.b16 %v1436, %v1429
    %v1871 = vpack.c.b16 %v1437, %v1430
    %v1872 = vpack.c.b16 %v1438, %v1431
    %v1873 = vpack.c.b16 %v1439, %v1432
    %v1874 = vpack.c.b16 %v1440, %v1433
    %v1875 = vpack.c.b16 %v1448, %v1441
    %v1876 = vpack.c.b16 %v1449, %v1442
    %v1877 = vpack.c.b16 %v1450, %v1443
    %v1878 = vpack.c.b16 %v1451, %v1444
    %v1879 = vpack.c.b16 %v1452, %v1445
    %v1880 = vpack.c.b16 %v1453, %v1446
    %v1881 = vpack.c.b16 %v1454, %v1447
    %v1882 = vpack.c.b16 %v1462, %v1455
    %v1883 = vpack.c.b16 %v1463, %v1456
    %v1884 = vpack.c.b16 %v1464, %v1457
    %v1885 = vpack.c.b16 %v1465, %v1458
    %v1886 = vpack.c.b16 %v1466, %v1459
    %v1887 = vpack.c.b16 %v1467, %v1460
    %v1888 = vpack.c.b16 %v1468, %v1461
    %v1889 = vpack.c.b16 %v1476, %v1469
    %v1890 = vpack.c.b16 %v1477, %v1470
    %v1891 = vpack.c.b16 %v1478, %v1471
    %v1892 = vpack.c.b16 %v1479, %v1472
    %v1893 = vpack.c.b16 %v1480, %v1473
    %v1894 = vpack.c.b16 %v1481, %v1474
    %v1895 = vpack.c.b16 %v1482, %v1475
    %v1896 = vpack.c.b16 %v1490, %v1483
    %v1897 = vpack.c.b16 %v1491, %v1484
    %v1898 = vpack.c.b16 %v1492, %v1485
    %v1899 = vpack.c.b16 %v1493, %v1486
    %v1900 = vpack.c.b16 %v1494, %v1487
    %v1901 = vpack.c.b16 %v1495, %v1488
    %v1902 = vpack.c.b16 %v1496, %v1489
    %v1903 = vpack.c.b16 %v1504, %v1497
    %v1904 = vpack.c.b16 %v1505, %v1498
    %v1905 = vpack.c.b16 %v1506, %v1499
    %v1906 = vpack.c.b16 %v1507, %v1500
    %v1907 = vpack.c.b16 %v1508, %v1501
    %v1908 = vpack.c.b16 %v1509, %v1502
    %v1909 = vpack.c.b16 %v1510, %v1503
    %v1910 = vpack.c.b16 %v1518, %v1511
    %v1911 = vpack.c.b16 %v1519, %v1512
    %v1912 = vpack.c.b16 %v1520, %v1513
    %v1913 = vpack.c.b16 %v1521, %v1514
    %v1914 = vpack.c.b16 %v1522, %v1515
    %v1915 = vpack.c.b16 %v1523, %v1516
    %v1916 = vpack.c.b16 %v1524, %v1517
    %v1917 = vpack.c.b16 %v1532, %v1525
    %v1918 = vpack.c.b16 %v1533, %v1526
    %v1919 = vpack.c.b16 %v1534, %v1527
    %v1920 = vpack.c.b16 %v1535, %v1528
    %v1921 = vpack.c.b16 %v1536, %v1529
    %v1922 = vpack.c.b16 %v1537, %v1530
    %v1923 = vpack.c.b16 %v1538, %v1531
    %v1924 = vpack.c.b16 %v1546, %v1539
    %v1925 = vpack.c.b16 %v1547, %v1540
    %v1926 = vpack.c.b16 %v1548, %v1541
    %v1927 = vpack.c.b16 %v1549, %v1542
    %v1928 = vpack.c.b16 %v1550, %v1543
    %v1929 = vpack.c.b16 %v1551, %v1544
    %v1930 = vpack.c.b16 %v1552, %v1545
    %v1931 = vpack.c.b16 %v1560, %v1553
    %v1932 = vpack.c.b16 %v1561, %v1554
    %v1933 = vpack.c.b16 %v1562, %v1555
    %v1934 = vpack.c.b16 %v1563, %v1556
    %v1935 = vpack.c.b16 %v1564, %v1557
    %v1936 = vpack.c.b16 %v1565, %v1558
    %v1937 = vpack.c.b16 %v1566, %v1559
    %v1938 = vpack.c.b16 %v1574, %v1567
    %v1939 = vpack.c.b16 %v1575, %v1568
    %v1940 = vpack.c.b16 %v1576, %v1569
    %v1941 = vpack.c.b16 %v1577, %v1570
    %v1942 = vpack.c.b16 %v1578, %v1571
    %v1943 = vpack.c.b16 %v1579, %v1572
    %v1944 = vpack.c.b16 %v1580, %v1573
    %v1945 = vpack.c.b16 %v1588, %v1581
    %v1946 = vpack.c.b16 %v1589, %v1582
    %v1947 = vpack.c.b16 %v1590, %v1583
    %v1948 = vpack.c.b16 %v1591, %v1584
    %v1949 = vpack.c.b16 %v1592, %v1585
    %v1950 = vpack.c.b16 %v1593, %v1586
    %v1951 = vpack.c.b16 %v1594, %v1587
    %v1952 = vpack.c.b16 %v1602, %v1595
    %v1953 = vpack.c.b16 %v1603, %v1596
    %v1954 = vpack.c.b16 %v1604, %v1597
    %v1955 = vpack.c.b16 %v1605, %v1598
    %v1956 = vpack.c.b16 %v1606, %v1599
    %v1957 = vpack.c.b16 %v1607, %v1600
    %v1958 = vpack.c.b16 %v1608, %v1601
    %v1959 = vpack.c.b16 %v1616, %v1609
    %v1960 = vpack.c.b16 %v1617, %v1610
    %v1961 = vpack.c.b16 %v1618, %v1611
    %v1962 = vpack.c.b16 %v1619, %v1612
    %v1963 = vpack.c.b16 %v1620, %v1613
    %v1964 = vpack.c.b16 %v1621, %v1614
    %v1965 = vpack.c.b16 %v1622, %v1615
    %v1966 = vpack.c.b16 %v1630, %v1623
    %v1967 = vpack.c.b16 %v1631, %v1624
    %v1968 = vpack.c.b16 %v1632, %v1625
    %v1969 = vpack.c.b16 %v1633, %v1626
    %v1970 = vpack.c.b16 %v1634, %v1627
    %v1971 = vpack.c.b16 %v1635, %v1628
    %v1972 = vpack.c.b16 %v1636, %v1629
    %v1973 = vpack.c.b16 %v1644, %v1637
    %v1974 = vpack.c.b16 %v1645, %v1638
    %v1975 = vpack.c.b16 %v1646, %v1639
    %v1976 = vpack.c.b16 %v1647, %v1640
    %v1977 = vpack.c.b16 %v1648, %v1641
    %v1978 = vpack.c.b16 %v1649, %v1642
    %v1979 = vpack.c.b16 %v1650, %v1643
    %v1980 = vpack.c.b16 %v1658, %v1651
    %v1981 = vpack.c.b16 %v1659, %v1652
    %v1982 = vpack.c.b16 %v1660, %v1653
    %v1983 = vpack.c.b16 %v1661, %v1654
    %v1984 = vpack.c.b16 %v1662, %v1655
    %v1985 = vpack.c.b16 %v1663, %v1656
    %v1986 = vpack.c.b16 %v1664, %v1657
    %v1987 = vpack.c.b16 %v1672, %v1665
    %v1988 = vpack.c.b16 %v1673, %v1666
    %v1989 = vpack.c.b16 %v1674, %v1667
    %v1990 = vpack.c.b16 %v1675, %v1668
    %v1991 = vpack.c.b16 %v1676, %v1669
    %v1992 = vpack.c.b16 %v1677, %v1670
    %v1993 = vpack.c.b16 %v1678, %v1671
    %v1994 = vpack.c.b16 %v1686, %v1679
    %v1995 = vpack.c.b16 %v1687, %v1680
    %v1996 = vpack.c.b16 %v1688, %v1681
    %v1997 = vpack.c.b16 %v1689, %v1682
    %v1998 = vpack.c.b16 %v1690, %v1683
    %v1999 = vpack.c.b16 %v1691, %v1684
    %v2000 = vpack.c.b16 %v1692, %v1685
    %v2001 = vpack.c.b16 %v1700, %v1693
    %v2002 = vpack.c.b16 %v1701, %v1694
    %v2003 = vpack.c.b16 %v1702, %v1695
    %v2004 = vpack.c.b16 %v1703, %v1696
    %v2005 = vpack.c.b16 %v1704, %v1697
    %v2006 = vpack.c.b16 %v1705, %v1698
    %v2007 = vpack.c.b16 %v1706, %v1699
    %v2008 = vpack.c.b16 %v1714, %v1707
    %v2009 = vpack.c.b16 %v1715, %v1708
    %v2010 = vpack.c.b16 %v1716, %v1709
    %v2011 = vpack.c.b16 %v1717, %v1710
    %v2012 = vpack.c.b16 %v1718, %v1711
    %v2013 = vpack.c.b16 %v1719, %v1712
    %v2014 = vpack.c.b16 %v1720, %v1713
    %v2015 = vpack.c.b16 %v1728, %v1721
    %v2016 = vpack.c.b16 %v1729, %v1722
    %v2017 = vpack.c.b16 %v1730, %v1723
    %v2018 = vpack.c.b16 %v1731, %v1724
    %v2019 = vpack.c.b16 %v1732, %v1725
    %v2020 = vpack.c.b16 %v1733, %v1726
    %v2021 = vpack.c.b16 %v1734, %v1727
    %v2022 = vpack.c.b16 %v1742, %v1735
    %v2023 = vpack.c.b16 %v1743, %v1736
    %v2024 = vpack.c.b16 %v1744, %v1737
    %v2025 = vpack.c.b16 %v1745, %v1738
    %v2026 = vpack.c.b16 %v1746, %v1739
    %v2027 = vpack.c.b16 %v1747, %v1740
    %v2028 = vpack.c.b16 %v1748, %v1741
    %v2029 = vpack.c.b16 %v1756, %v1749
    %v2030 = vpack.c.b16 %v1757, %v1750
    %v2031 = vpack.c.b16 %v1758, %v1751
    %v2032 = vpack.c.b16 %v1759, %v1752
    %v2033 = vpack.c.b16 %v1760, %v1753
    %v2034 = vpack.c.b16 %v1761, %v1754
    %v2035 = vpack.c.b16 %v1762, %v1755
    %v2036 = vpack.c.b16 %v1770, %v1763
    %v2037 = vpack.c.b16 %v1771, %v1764
    %v2038 = vpack.c.b16 %v1772, %v1765
    %v2039 = vpack.c.b16 %v1773, %v1766
    %v2040 = vpack.c.b16 %v1774, %v1767
    %v2041 = vpack.c.b16 %v1775, %v1768
    %v2042 = vpack.c.b16 %v1776, %v1769
    %v2043 = vpack.c.b16 %v1784, %v1777
    %v2044 = vpack.c.b16 %v1785, %v1778
    %v2045 = vpack.c.b16 %v1786, %v1779
    %v2046 = vpack.c.b16 %v1787, %v1780
    %v2047 = vpack.c.b16 %v1788, %v1781
    %v2048 = vpack.c.b16 %v1789, %v1782
    %v2049 = vpack.c.b16 %v1790, %v1783
    %v2050 = vpack.c.b16 %v1798, %v1791
    %v2051 = vpack.c.b16 %v1799, %v1792
    %v2052 = vpack.c.b16 %v1800, %v1793
    %v2053 = vpack.c.b16 %v1801, %v1794
    %v2054 = vpack.c.b16 %v1802, %v1795
    %v2055 = vpack.c.b16 %v1803, %v1796
    %v2056 = vpack.c.b16 %v1804, %v1797
    %v2057 = vpack.c.b16 %v1812, %v1805
    %v2058 = vpack.c.b16 %v1813, %v1806
    %v2059 = vpack.c.b16 %v1814, %v1807
    %v2060 = vpack.c.b16 %v1815, %v1808
    %v2061 = vpack.c.b16 %v1816, %v1809
    %v2062 = vpack.c.b16 %v1817, %v1810
    %v2063 = vpack.c.b16 %v1818, %v1811
    %v2064 = vpack.c.b16 %v1826, %v1819
    %v2065 = vpack.c.b16 %v1827, %v1820
    %v2066 = vpack.c.b16 %v1828, %v1821
    %v2067 = vpack.c.b16 %v1829, %v1822
    %v2068 = vpack.c.b16 %v1830, %v1823
    %v2069 = vpack.c.b16 %v1831, %v1824
    %v2070 = vpack.c.b16 %v1832, %v1825
    %v2071 = vpack.c.b16 %v1840, %v1833
    %v2072 = vpack.c.b16 %v1841, %v1834
    %v2073 = vpack.c.b16 %v1842, %v1835
    %v2074 = vpack.c.b16 %v1843, %v1836
    %v2075 = vpack.c.b16 %v1844, %v1837
    %v2076 = vpack.c.b16 %v1845, %v1838
    %v2077 = vpack.c.b16 %v1846, %v1839
    %v2078 = vpack.c.b16 %v1854, %v1847
    %v2079 = vpack.c.b16 %v1855, %v1848
    %v2080 = vpack.c.b16 %v1856, %v1849
    %v2081 = vpack.c.b16 %v1857, %v1850
    %v2082 = vpack.c.b16 %v1858, %v1851
    %v2083 = vpack.c.b16 %v1859, %v1852
    %v2084 = vpack.c.b16 %v1860, %v1853
    %2309 = vmatprep.subr.bf16.mxu0 %v1862
    %2310 = vmatpush1.bf16.msra.mxu0 %v1861
    %2311 = vmatprep.subr.bf16.mxu0 %v1869
    %2312 = vmatpush1.bf16.msra.mxu0 %v1868
    %2313 = vmatprep.subr.bf16.mxu0 %v1876
    %2314 = vmatpush1.bf16.msra.mxu0 %v1875
    %2315 = vmatprep.subr.bf16.mxu0 %v1883
    %2316 = vmatpush1.bf16.msra.mxu0 %v1882
    %2317 = vmatprep.subr.bf16.mxu0 %v1890
    %2318 = vmatpush1.bf16.msra.mxu0 %v1889
    %2319 = vmatprep.subr.bf16.mxu0 %v1897
    %2320 = vmatpush1.bf16.msra.mxu0 %v1896
    %2321 = vmatprep.subr.bf16.mxu0 %v1904
    %2322 = vmatpush1.bf16.msra.mxu0 %v1903
    %2323 = vmatprep.subr.bf16.mxu0 %v1911
    %2324 = vmatpush1.bf16.msra.mxu0 %v1910
    %2325 = vmatprep.subr.bf16.mxu0 %v1918
    %2326 = vmatpush1.bf16.msra.mxu0 %v1917
    %2327 = vmatprep.subr.bf16.mxu0 %v1925
    %2328 = vmatpush1.bf16.msra.mxu0 %v1924
    %2329 = vmatprep.subr.bf16.mxu0 %v1932
    %2330 = vmatpush1.bf16.msra.mxu0 %v1931
    %2331 = vmatprep.subr.bf16.mxu0 %v1939
    %2332 = vmatpush1.bf16.msra.mxu0 %v1938
    %2333 = vmatprep.subr.bf16.mxu0 %v1946
    %2334 = vmatpush1.bf16.msra.mxu0 %v1945
    %2335 = vmatprep.subr.bf16.mxu0 %v1953
    %2336 = vmatpush1.bf16.msra.mxu0 %v1952
    %2337 = vmatprep.subr.bf16.mxu0 %v1960
    %2338 = vmatpush1.bf16.msra.mxu0 %v1959
    %2339 = vmatprep.subr.bf16.mxu0 %v1967
    %2340 = vmatpush1.bf16.msra.mxu0 %v1966
    %2341 = vmatprep.mubr.bf16.mxu0 %v861
    %2342 = vmatmul.mubr.bf16.gmra.mrb[0].mxu0 %v860
    %v2343 = vpop.f32.mrb[0].mxu0
    %v2344 = vadd.f32 %v1125, %v2343
    %v2345 = vpop.f32.mrb[0].mxu0
    %v2346 = vadd.f32 %v1129, %v2345
    %v2347 = vpop.f32.mrb[0].mxu0
    %v2348 = vpop.f32.mrb[0].mxu0
    %2349 = vdwg.mxu0
    %2350 = vmatprep.subr.bf16.mxu0 %v1974
    %2351 = vmatpush1.bf16.msra.mxu0 %v1973
    %2352 = vmatprep.subr.bf16.mxu0 %v1981
    %2353 = vmatpush1.bf16.msra.mxu0 %v1980
    %2354 = vmatprep.subr.bf16.mxu0 %v1988
    %2355 = vmatpush1.bf16.msra.mxu0 %v1987
    %2356 = vmatprep.subr.bf16.mxu0 %v1995
    %2357 = vmatpush1.bf16.msra.mxu0 %v1994
    %2358 = vmatprep.subr.bf16.mxu0 %v2002
    %2359 = vmatpush1.bf16.msra.mxu0 %v2001
    %2360 = vmatprep.subr.bf16.mxu0 %v2009
    %2361 = vmatpush1.bf16.msra.mxu0 %v2008
    %2362 = vmatprep.subr.bf16.mxu0 %v2016
    %2363 = vmatpush1.bf16.msra.mxu0 %v2015
    %2364 = vmatprep.subr.bf16.mxu0 %v2023
    %2365 = vmatpush1.bf16.msra.mxu0 %v2022
    %2366 = vmatprep.subr.bf16.mxu0 %v2030
    %2367 = vmatpush1.bf16.msra.mxu0 %v2029
    %2368 = vmatprep.subr.bf16.mxu0 %v2037
    %2369 = vmatpush1.bf16.msra.mxu0 %v2036
    %2370 = vmatprep.subr.bf16.mxu0 %v2044
    %2371 = vmatpush1.bf16.msra.mxu0 %v2043
    %2372 = vmatprep.subr.bf16.mxu0 %v2051
    %2373 = vmatpush1.bf16.msra.mxu0 %v2050
    %2374 = vmatprep.subr.bf16.mxu0 %v2058
    %2375 = vmatpush1.bf16.msra.mxu0 %v2057
    %2376 = vmatprep.subr.bf16.mxu0 %v2065
    %2377 = vmatpush1.bf16.msra.mxu0 %v2064
    %2378 = vmatprep.subr.bf16.mxu0 %v2072
    %2379 = vmatpush1.bf16.msra.mxu0 %v2071
    %2380 = vmatprep.subr.bf16.mxu0 %v2079
    %2381 = vmatpush1.bf16.msra.mxu0 %v2078
    %2382 = vmatprep.mubr.bf16.mxu0 %v863
    %2383 = vmatmul.mubr.bf16.gmra.mrb[0].mxu0 %v862
    %v2384 = vpop.f32.mrb[0].mxu0
    %v2385 = vadd.f32 %v2344, %v2384
    %v2386 = vpop.f32.mrb[0].mxu0
    %v2387 = vadd.f32 %v2346, %v2386
    %v2388 = vpop.f32.mrb[0].mxu0
    %v2389 = vpop.f32.mrb[0].mxu0
    %2390 = vdwg.mxu0
    %2391 = vmatprep.subr.bf16.mxu0 %v1864
    %2392 = vmatpush1.bf16.msra.mxu0 %v1863
    %2393 = vmatprep.subr.bf16.mxu0 %v1871
    %2394 = vmatpush1.bf16.msra.mxu0 %v1870
    %2395 = vmatprep.subr.bf16.mxu0 %v1878
    %2396 = vmatpush1.bf16.msra.mxu0 %v1877
    %2397 = vmatprep.subr.bf16.mxu0 %v1885
    %2398 = vmatpush1.bf16.msra.mxu0 %v1884
    %2399 = vmatprep.subr.bf16.mxu0 %v1892
    %2400 = vmatpush1.bf16.msra.mxu0 %v1891
    %2401 = vmatprep.subr.bf16.mxu0 %v1899
    %2402 = vmatpush1.bf16.msra.mxu0 %v1898
    %2403 = vmatprep.subr.bf16.mxu0 %v1906
    %2404 = vmatpush1.bf16.msra.mxu0 %v1905
    %2405 = vmatprep.subr.bf16.mxu0 %v1913
    %2406 = vmatpush1.bf16.msra.mxu0 %v1912
    %2407 = vmatprep.subr.bf16.mxu0 %v1920
    %2408 = vmatpush1.bf16.msra.mxu0 %v1919
    %2409 = vmatprep.subr.bf16.mxu0 %v1927
    %2410 = vmatpush1.bf16.msra.mxu0 %v1926
    %2411 = vmatprep.subr.bf16.mxu0 %v1934
    %2412 = vmatpush1.bf16.msra.mxu0 %v1933
    %2413 = vmatprep.subr.bf16.mxu0 %v1941
    %2414 = vmatpush1.bf16.msra.mxu0 %v1940
    %2415 = vmatprep.subr.bf16.mxu0 %v1948
    %2416 = vmatpush1.bf16.msra.mxu0 %v1947
    %2417 = vmatprep.subr.bf16.mxu0 %v1955
    %2418 = vmatpush1.bf16.msra.mxu0 %v1954
    %2419 = vmatprep.subr.bf16.mxu0 %v1962
    %2420 = vmatpush1.bf16.msra.mxu0 %v1961
    %2421 = vmatprep.subr.bf16.mxu0 %v1969
    %2422 = vmatpush1.bf16.msra.mxu0 %v1968
    %2423 = vmatprep.mubr.bf16.mxu0 %v861
    %2424 = vmatmul.mubr.bf16.gmra.mrb[0].mxu0 %v860
    %v2425 = vpop.f32.mrb[0].mxu0
    %v2426 = vadd.f32 %v1133, %v2425
    %v2427 = vpop.f32.mrb[0].mxu0
    %v2428 = vadd.f32 %v1137, %v2427
    %v2429 = vpop.f32.mrb[0].mxu0
    %v2430 = vpop.f32.mrb[0].mxu0
    %2431 = vdwg.mxu0
    %2432 = vmatprep.subr.bf16.mxu0 %v1976
    %2433 = vmatpush1.bf16.msra.mxu0 %v1975
    %2434 = vmatprep.subr.bf16.mxu0 %v1983
    %2435 = vmatpush1.bf16.msra.mxu0 %v1982
    %2436 = vmatprep.subr.bf16.mxu0 %v1990
    %2437 = vmatpush1.bf16.msra.mxu0 %v1989
    %2438 = vmatprep.subr.bf16.mxu0 %v1997
    %2439 = vmatpush1.bf16.msra.mxu0 %v1996
    %2440 = vmatprep.subr.bf16.mxu0 %v2004
    %2441 = vmatpush1.bf16.msra.mxu0 %v2003
    %2442 = vmatprep.subr.bf16.mxu0 %v2011
    %2443 = vmatpush1.bf16.msra.mxu0 %v2010
    %2444 = vmatprep.subr.bf16.mxu0 %v2018
    %2445 = vmatpush1.bf16.msra.mxu0 %v2017
    %2446 = vmatprep.subr.bf16.mxu0 %v2025
    %2447 = vmatpush1.bf16.msra.mxu0 %v2024
    %2448 = vmatprep.subr.bf16.mxu0 %v2032
    %2449 = vmatpush1.bf16.msra.mxu0 %v2031
    %2450 = vmatprep.subr.bf16.mxu0 %v2039
    %2451 = vmatpush1.bf16.msra.mxu0 %v2038
    %2452 = vmatprep.subr.bf16.mxu0 %v2046
    %2453 = vmatpush1.bf16.msra.mxu0 %v2045
    %2454 = vmatprep.subr.bf16.mxu0 %v2053
    %2455 = vmatpush1.bf16.msra.mxu0 %v2052
    %2456 = vmatprep.subr.bf16.mxu0 %v2060
    %2457 = vmatpush1.bf16.msra.mxu0 %v2059
    %2458 = vmatprep.subr.bf16.mxu0 %v2067
    %2459 = vmatpush1.bf16.msra.mxu0 %v2066
    %2460 = vmatprep.subr.bf16.mxu0 %v2074
    %2461 = vmatpush1.bf16.msra.mxu0 %v2073
    %2462 = vmatprep.subr.bf16.mxu0 %v2081
    %2463 = vmatpush1.bf16.msra.mxu0 %v2080
    %2464 = vmatprep.mubr.bf16.mxu0 %v863
    %2465 = vmatmul.mubr.bf16.gmra.mrb[0].mxu0 %v862
    %v2466 = vpop.f32.mrb[0].mxu0
    %v2467 = vadd.f32 %v2426, %v2466
    %v2468 = vpop.f32.mrb[0].mxu0
    %v2469 = vadd.f32 %v2428, %v2468
    %v2470 = vpop.f32.mrb[0].mxu0
    %v2471 = vpop.f32.mrb[0].mxu0
    %2472 = vdwg.mxu0
    %2473 = vmatprep.subr.bf16.mxu0 %v1866
    %2474 = vmatpush1.bf16.msra.mxu0 %v1865
    %2475 = vmatprep.subr.bf16.mxu0 %v1873
    %2476 = vmatpush1.bf16.msra.mxu0 %v1872
    %2477 = vmatprep.subr.bf16.mxu0 %v1880
    %2478 = vmatpush1.bf16.msra.mxu0 %v1879
    %2479 = vmatprep.subr.bf16.mxu0 %v1887
    %2480 = vmatpush1.bf16.msra.mxu0 %v1886
    %2481 = vmatprep.subr.bf16.mxu0 %v1894
    %2482 = vmatpush1.bf16.msra.mxu0 %v1893
    %2483 = vmatprep.subr.bf16.mxu0 %v1901
    %2484 = vmatpush1.bf16.msra.mxu0 %v1900
    %2485 = vmatprep.subr.bf16.mxu0 %v1908
    %2486 = vmatpush1.bf16.msra.mxu0 %v1907
    %2487 = vmatprep.subr.bf16.mxu0 %v1915
    %2488 = vmatpush1.bf16.msra.mxu0 %v1914
    %2489 = vmatprep.subr.bf16.mxu0 %v1922
    %2490 = vmatpush1.bf16.msra.mxu0 %v1921
    %2491 = vmatprep.subr.bf16.mxu0 %v1929
    %2492 = vmatpush1.bf16.msra.mxu0 %v1928
    %2493 = vmatprep.subr.bf16.mxu0 %v1936
    %2494 = vmatpush1.bf16.msra.mxu0 %v1935
    %2495 = vmatprep.subr.bf16.mxu0 %v1943
    %2496 = vmatpush1.bf16.msra.mxu0 %v1942
    %2497 = vmatprep.subr.bf16.mxu0 %v1950
    %2498 = vmatpush1.bf16.msra.mxu0 %v1949
    %2499 = vmatprep.subr.bf16.mxu0 %v1957
    %2500 = vmatpush1.bf16.msra.mxu0 %v1956
    %2501 = vmatprep.subr.bf16.mxu0 %v1964
    %2502 = vmatpush1.bf16.msra.mxu0 %v1963
    %2503 = vmatprep.subr.bf16.mxu0 %v1971
    %2504 = vmatpush1.bf16.msra.mxu0 %v1970
    %2505 = vmatprep.mubr.bf16.mxu0 %v861
    %2506 = vmatmul.mubr.bf16.gmra.mrb[0].mxu0 %v860
    %v2507 = vpop.f32.mrb[0].mxu0
    %v2508 = vadd.f32 %v1141, %v2507
    %v2509 = vpop.f32.mrb[0].mxu0
    %v2510 = vadd.f32 %v1145, %v2509
    %v2511 = vpop.f32.mrb[0].mxu0
    %v2512 = vpop.f32.mrb[0].mxu0
    %2513 = vdwg.mxu0
    %2514 = vmatprep.subr.bf16.mxu0 %v1978
    %2515 = vmatpush1.bf16.msra.mxu0 %v1977
    %2516 = vmatprep.subr.bf16.mxu0 %v1985
    %2517 = vmatpush1.bf16.msra.mxu0 %v1984
    %2518 = vmatprep.subr.bf16.mxu0 %v1992
    %2519 = vmatpush1.bf16.msra.mxu0 %v1991
    %2520 = vmatprep.subr.bf16.mxu0 %v1999
    %2521 = vmatpush1.bf16.msra.mxu0 %v1998
    %2522 = vmatprep.subr.bf16.mxu0 %v2006
    %2523 = vmatpush1.bf16.msra.mxu0 %v2005
    %2524 = vmatprep.subr.bf16.mxu0 %v2013
    %2525 = vmatpush1.bf16.msra.mxu0 %v2012
    %2526 = vmatprep.subr.bf16.mxu0 %v2020
    %2527 = vmatpush1.bf16.msra.mxu0 %v2019
    %2528 = vmatprep.subr.bf16.mxu0 %v2027
    %2529 = vmatpush1.bf16.msra.mxu0 %v2026
    %2530 = vmatprep.subr.bf16.mxu0 %v2034
    %2531 = vmatpush1.bf16.msra.mxu0 %v2033
    %2532 = vmatprep.subr.bf16.mxu0 %v2041
    %2533 = vmatpush1.bf16.msra.mxu0 %v2040
    %2534 = vmatprep.subr.bf16.mxu0 %v2048
    %2535 = vmatpush1.bf16.msra.mxu0 %v2047
    %2536 = vmatprep.subr.bf16.mxu0 %v2055
    %2537 = vmatpush1.bf16.msra.mxu0 %v2054
    %2538 = vmatprep.subr.bf16.mxu0 %v2062
    %2539 = vmatpush1.bf16.msra.mxu0 %v2061
    %2540 = vmatprep.subr.bf16.mxu0 %v2069
    %2541 = vmatpush1.bf16.msra.mxu0 %v2068
    %2542 = vmatprep.subr.bf16.mxu0 %v2076
    %2543 = vmatpush1.bf16.msra.mxu0 %v2075
    %2544 = vmatprep.subr.bf16.mxu0 %v2083
    %2545 = vmatpush1.bf16.msra.mxu0 %v2082
    %2546 = vmatprep.mubr.bf16.mxu0 %v863
    %2547 = vmatmul.mubr.bf16.gmra.mrb[0].mxu0 %v862
    %v2548 = vpop.f32.mrb[0].mxu0
    %v2549 = vadd.f32 %v2508, %v2548
    %v2550 = vpop.f32.mrb[0].mxu0
    %v2551 = vadd.f32 %v2510, %v2550
    %v2552 = vpop.f32.mrb[0].mxu0
    %v2553 = vpop.f32.mrb[0].mxu0
    %2554 = vdwg.mxu0
    %2555 = vmatprep.subr.bf16.mxu0 0
    %2556 = vmatpush1.bf16.msra.mxu0 %v1867
    %2557 = vmatprep.subr.bf16.mxu0 0
    %2558 = vmatpush1.bf16.msra.mxu0 %v1874
    %2559 = vmatprep.subr.bf16.mxu0 0
    %2560 = vmatpush1.bf16.msra.mxu0 %v1881
    %2561 = vmatprep.subr.bf16.mxu0 0
    %2562 = vmatpush1.bf16.msra.mxu0 %v1888
    %2563 = vmatprep.subr.bf16.mxu0 0
    %2564 = vmatpush1.bf16.msra.mxu0 %v1895
    %2565 = vmatprep.subr.bf16.mxu0 0
    %2566 = vmatpush1.bf16.msra.mxu0 %v1902
    %2567 = vmatprep.subr.bf16.mxu0 0
    %2568 = vmatpush1.bf16.msra.mxu0 %v1909
    %2569 = vmatprep.subr.bf16.mxu0 0
    %2570 = vmatpush1.bf16.msra.mxu0 %v1916
    %2571 = vmatprep.subr.bf16.mxu0 0
    %2572 = vmatpush1.bf16.msra.mxu0 %v1923
    %2573 = vmatprep.subr.bf16.mxu0 0
    %2574 = vmatpush1.bf16.msra.mxu0 %v1930
    %2575 = vmatprep.subr.bf16.mxu0 0
    %2576 = vmatpush1.bf16.msra.mxu0 %v1937
    %2577 = vmatprep.subr.bf16.mxu0 0
    %2578 = vmatpush1.bf16.msra.mxu0 %v1944
    %2579 = vmatprep.subr.bf16.mxu0 0
    %2580 = vmatpush1.bf16.msra.mxu0 %v1951
    %2581 = vmatprep.subr.bf16.mxu0 0
    %2582 = vmatpush1.bf16.msra.mxu0 %v1958
    %2583 = vmatprep.subr.bf16.mxu0 0
    %2584 = vmatpush1.bf16.msra.mxu0 %v1965
    %2585 = vmatprep.subr.bf16.mxu0 0
    %2586 = vmatpush1.bf16.msra.mxu0 %v1972
    %2587 = vmatprep.mubr.bf16.mxu0 %v861
    %2588 = vmatmul.mubr.bf16.gmra.mrb[0].mxu0 %v860
    %v2589 = vpop.f32.mrb[0].mxu0
    %v2590 = vadd.f32 %v1149, %v2589
    %v2591 = vpop.f32.mrb[0].mxu0
    %v2592 = vpop.f32.mrb[0].mxu0
    %v2593 = vpop.f32.mrb[0].mxu0
    %2594 = vdwg.mxu0
    %2595 = vmatprep.subr.bf16.mxu0 0
    %2596 = vmatpush1.bf16.msra.mxu0 %v1979
    %2597 = vmatprep.subr.bf16.mxu0 0
    %2598 = vmatpush1.bf16.msra.mxu0 %v1986
    %2599 = vmatprep.subr.bf16.mxu0 0
    %2600 = vmatpush1.bf16.msra.mxu0 %v1993
    %2601 = vmatprep.subr.bf16.mxu0 0
    %2602 = vmatpush1.bf16.msra.mxu0 %v2000
    %2603 = vmatprep.subr.bf16.mxu0 0
    %2604 = vmatpush1.bf16.msra.mxu0 %v2007
    %2605 = vmatprep.subr.bf16.mxu0 0
    %2606 = vmatpush1.bf16.msra.mxu0 %v2014
    %2607 = vmatprep.subr.bf16.mxu0 0
    %2608 = vmatpush1.bf16.msra.mxu0 %v2021
    %2609 = vmatprep.subr.bf16.mxu0 0
    %2610 = vmatpush1.bf16.msra.mxu0 %v2028
    %2611 = vmatprep.subr.bf16.mxu0 0
    %2612 = vmatpush1.bf16.msra.mxu0 %v2035
    %2613 = vmatprep.subr.bf16.mxu0 0
    %2614 = vmatpush1.bf16.msra.mxu0 %v2042
    %2615 = vmatprep.subr.bf16.mxu0 0
    %2616 = vmatpush1.bf16.msra.mxu0 %v2049
    %2617 = vmatprep.subr.bf16.mxu0 0
    %2618 = vmatpush1.bf16.msra.mxu0 %v2056
    %2619 = vmatprep.subr.bf16.mxu0 0
    %2620 = vmatpush1.bf16.msra.mxu0 %v2063
    %2621 = vmatprep.subr.bf16.mxu0 0
    %2622 = vmatpush1.bf16.msra.mxu0 %v2070
    %2623 = vmatprep.subr.bf16.mxu0 0
    %2624 = vmatpush1.bf16.msra.mxu0 %v2077
    %2625 = vmatprep.subr.bf16.mxu0 0
    %2626 = vmatpush1.bf16.msra.mxu0 %v2084
    %2627 = vmatprep.mubr.bf16.mxu0 %v863
    %2628 = vmatmul.mubr.bf16.gmra.mrb[0].mxu0 %v862
    %v2629 = vpop.f32.mrb[0].mxu0
    %v2630 = vadd.f32 %v2590, %v2629
    %v2631 = vpop.f32.mrb[0].mxu0
    %v2632 = vpop.f32.mrb[0].mxu0
    %v2633 = vpop.f32.mrb[0].mxu0
    %2634 = vdwg.mxu0
    %v2635 = vxor.u32 %v2385, 2147483648
    %v2636 = vxor.u32 %v2387, 2147483648
    %v2637 = vxor.u32 %v2467, 2147483648
    %v2638 = vxor.u32 %v2469, 2147483648
    %v2639 = vxor.u32 %v2549, 2147483648
    %v2640 = vxor.u32 %v2551, 2147483648
    %v2641 = vxor.u32 %v2630, 2147483648
    %v2642 = vmul.f32 %v2635, 1.442695
    %v2643 = vpow.pop %v2642
    %v2644 = vmul.f32 %v2636, 1.442695
    %v2645 = vpow.pop %v2644
    %v2646 = vmul.f32 %v2637, 1.442695
    %v2647 = vpow.pop %v2646
    %v2648 = vmul.f32 %v2638, 1.442695
    %v2649 = vpow.pop %v2648
    %v2650 = vmul.f32 %v2639, 1.442695
    %v2651 = vpow.pop %v2650
    %v2652 = vmul.f32 %v2640, 1.442695
    %v2653 = vpow.pop %v2652
    %v2654 = vmul.f32 %v2641, 1.442695
    %v2655 = vpow.pop %v2654
    %v2656 = vadd.f32 %v2643, 1.0
    %v2657 = vadd.f32 %v2645, 1.0
    %v2658 = vadd.f32 %v2647, 1.0
    %v2659 = vadd.f32 %v2649, 1.0
    %v2660 = vadd.f32 %v2651, 1.0
    %v2661 = vadd.f32 %v2653, 1.0
    %v2662 = vadd.f32 %v2655, 1.0
    %v2663 = vrcp.pop %v2656
    %v2664 = vmul.f32 1.0, %v2663
    %v2665 = vrcp.pop %v2657
    %v2666 = vmul.f32 1.0, %v2665
    %v2667 = vrcp.pop %v2658
    %v2668 = vmul.f32 1.0, %v2667
    %v2669 = vrcp.pop %v2659
    %v2670 = vmul.f32 1.0, %v2669
    %v2671 = vrcp.pop %v2660
    %v2672 = vmul.f32 1.0, %v2671
    %v2673 = vrcp.pop %v2661
    %v2674 = vmul.f32 1.0, %v2673
    %v2675 = vrcp.pop %v2662
    %v2676 = vmul.f32 1.0, %v2675
    %2677 = vst [vmem:[#allocation11] sm:$0xff] %v2664
    %2678 = vst [vmem:[#allocation11 + $0x8] sm:$0xff] %v2666
    %2679 = vst [vmem:[#allocation11 + $0x10] sm:$0xff] %v2668
    %2680 = vst [vmem:[#allocation11 + $0x18] sm:$0xff] %v2670
    %2681 = vst [vmem:[#allocation11 + $0x20] sm:$0xff] %v2672
    %2682 = vst [vmem:[#allocation11 + $0x28] sm:$0xff] %v2674
    %2683 = vst [vmem:[#allocation11 + $0x30] sm:$0xff] %v2676
    // Predicated region
    $region58: #{tpu_custom_call.1} parent=1 // pred_check
      _
    $region59: #{tpu_custom_call.1} parent=1 // pred_check_branch
      %2685 = sbr.rel (0) target = $region61
    $region60: #{tpu_custom_call.1} parent=1 // pred_region
      %s2687 = ssub.s32 896, 896
      %2688 = vsyncadd [#allocation4], %s2687
      %s2690 = sshll.u32 [#allocation11], 4
      %s2691 = int_to_ptr.vmem [resolvable:$true] %s2690
      %2693 = dma.vmem_to_hbm [thread:$0]  %s2691, 896, %s9, [#allocation4]
    $region61: #{tpu_custom_call.1} parent=1 // pred_fallthru
      _
    // Predicated region
    $region62: #{tpu_custom_call.1} parent=1 // pred_check
      _
    $region63: #{tpu_custom_call.1} parent=1 // pred_check_branch
      %2695 = sbr.rel (0) target = $region65
    $region64: #{tpu_custom_call.1} parent=1 // pred_region
      %2696 = dma.done [#allocation4], 896
    $region65: #{tpu_custom_call.1} parent=1 // pred_fallthru
      _
    %2697 = vsyncpa [#allocation3], 1
    %2698 = vsyncpa [#allocation6], 1
    %2699 = vsyncpa [#allocation9], 1
    %2700 = vsyncpa [#allocation4], 1

</llo_original>
